<compile_context>
chip_gen: v7x
topology: tpu7x:2x2x1
jax: 0.10.0
libtpu: 0.0.40
codegen_flags: <defaults>
</compile_context>

<pallas_src>
import jax
import jax.numpy as jnp
from jax import lax
from jax.experimental import pallas as pl
from jax.experimental.pallas import tpu as pltpu

# --- problem sizes (small, consistent with the module) ---
SEQ = 8              # L
BATCH = 2            # N
D_MODEL = 32         # d_model
N_HEAD = 4
HEAD_DIM = D_MODEL // N_HEAD
D_FF = 4 * D_MODEL
EPS = 1e-12          # TF-style LayerNorm eps from the module (kept faithful)
TOKENS = SEQ * BATCH  # rows in seq-major order: row = l * BATCH + n
NEG_INF = -1e30


def _layer_norm(x, w, b):
    u = jnp.mean(x, axis=-1, keepdims=True)
    s = jnp.mean((x - u) ** 2, axis=-1, keepdims=True)
    return w * ((x - u) * lax.rsqrt(s + EPS)) + b


def residual_attention_block_kernel(
    x_ref,                       # (TOKENS, D)   seq-major rows (slab axis squeezed)
    ln1w_ref, ln1b_ref,          # (1, D)
    wqkv_ref,                    # (D, 3D)  columns = [q | k | v], scale folded into q
    bqkv_ref,                    # (1, 3D)
    wo_ref,                      # (D, D)   out_proj.weight.T
    bo_ref,                      # (1, D)
    ln2w_ref, ln2b_ref,          # (1, D)
    wfc_ref, bfc_ref,            # (D, 4D), (1, 4D)     (c_fc.weight.T)
    wproj_ref, bproj_ref,        # (4D, D), (1, D)      (c_proj.weight.T)
    o_ref,                       # (TOKENS, D)
):
    f32 = jnp.float32
    T, D, H, hd = TOKENS, D_MODEL, N_HEAD, HEAD_DIM

    x = x_ref[...].astype(f32)

    # ---- x + out_proj(MHA(LN1(x))) ----
    h = _layer_norm(x, ln1w_ref[...], ln1b_ref[...])

    # Combined QKV projection: single lane-dense matmul + one bias row.
    qkv = jnp.dot(h, wqkv_ref[...], preferred_element_type=f32) + bqkv_ref[...]

    # Split into per-head (H, T, hd) only where the score / PV matmuls need it.
    def heads(a):                                     # (T, D) -> (H, T, hd)
        return jnp.transpose(a.reshape(T, H, hd), (1, 0, 2))

    qh = heads(qkv[:, 0:D])
    kh = heads(qkv[:, D:2 * D])
    vh = heads(qkv[:, 2 * D:3 * D])

    # Scores over all token pairs, masked down to same-batch pairs
    # (rows are seq-major, so token r belongs to batch r % BATCH).
    s = lax.dot_general(qh, kh, (((2,), (2,)), ((0,), (0,))),
                        preferred_element_type=f32)   # (H, T, T)
    ri = lax.broadcasted_iota(jnp.int32, (T, T), 0)
    ci = lax.broadcasted_iota(jnp.int32, (T, T), 1)
    same_batch = (ri % BATCH) == (ci % BATCH)
    s = jnp.where(jnp.broadcast_to(same_batch[None, :, :], s.shape), s, NEG_INF)

    # Numerically-stable softmax with an EXACT reciprocal (EUP is idle here,
    # so exact costs nothing and attention rows sum to 1).
    s = s - jnp.max(s, axis=-1, keepdims=True)
    p = jnp.exp(s)
    p = p / jnp.sum(p, axis=-1, keepdims=True)

    o = lax.dot_general(p, vh, (((2,), (1,)), ((0,), (0,))),
                        preferred_element_type=f32)   # (H, T, hd)

    # One small relayout (H, T, hd) -> (T, D), then a single dense out-proj.
    o2 = jnp.transpose(o, (1, 0, 2)).reshape(T, D)
    attn = jnp.dot(o2, wo_ref[...], preferred_element_type=f32) + bo_ref[...]
    x = x + attn

    # ---- x + MLP(LN2(x)) ----
    h2 = _layer_norm(x, ln2w_ref[...], ln2b_ref[...])
    fc = jnp.dot(h2, wfc_ref[...], preferred_element_type=f32) + bfc_ref[...]
    fc = fc * jax.nn.sigmoid(1.702 * fc)               # QuickGELU
    proj = jnp.dot(fc, wproj_ref[...], preferred_element_type=f32) + bproj_ref[...]

    o_ref[...] = (x + proj).astype(o_ref.dtype)


def prepare_params(p):
    """One-time parameter prep: combined (D, 3D) QKV weight (x @ W layout) with
    1/sqrt(head_dim) folded into the Q columns/bias; weight transposes for the
    out-proj / MLP matmuls."""
    D = D_MODEL
    scale = HEAD_DIM ** -0.5

    wq = p['in_proj_w'][0 * D:1 * D].T * scale         # (D, D), x @ W layout
    wk = p['in_proj_w'][1 * D:2 * D].T
    wv = p['in_proj_w'][2 * D:3 * D].T
    wqkv = jnp.concatenate([wq, wk, wv], axis=1)       # (D, 3D)
    bqkv = jnp.concatenate([p['in_proj_b'][0 * D:1 * D] * scale,
                            p['in_proj_b'][1 * D:2 * D],
                            p['in_proj_b'][2 * D:3 * D]]).reshape(1, 3 * D)

    return dict(
        ln1_w=p['ln1_w'].reshape(1, D), ln1_b=p['ln1_b'].reshape(1, D),
        wqkv=wqkv, bqkv=bqkv,
        wo=p['out_proj_w'].T,                          # (D, D)
        bo=p['out_proj_b'].reshape(1, D),
        ln2_w=p['ln2_w'].reshape(1, D), ln2_b=p['ln2_b'].reshape(1, D),
        wfc=p['c_fc_w'].T, bfc=p['c_fc_b'].reshape(1, D_FF),
        wproj=p['c_proj_w'].T, bproj=p['c_proj_b'].reshape(1, D),
    )


def residual_attention_block(x, kp):
    """x: (SEQ, BATCH, D_MODEL) float32 — same layout as the PyTorch module.
    kp: output of prepare_params().

    Structured as a grid over independent (L, N) slabs with VMEM-resident
    weights (constant index_map) and the slab axis "parallel" (v7x megacore);
    here there is a single slab so the grid is (1,)."""
    L, N, D = x.shape
    T = L * N
    x3 = x.reshape(1, T, D)                  # (slabs, T, D) — free reshape, no copy
    num_slabs = 1

    weights = (kp['ln1_w'], kp['ln1_b'],
               kp['wqkv'], kp['bqkv'], kp['wo'], kp['bo'],
               kp['ln2_w'], kp['ln2_b'],
               kp['wfc'], kp['bfc'], kp['wproj'], kp['bproj'])

    slab_spec = pl.BlockSpec((None, T, D), lambda s: (s, 0, 0))
    weight_specs = [pl.BlockSpec(w.shape, lambda s: (0, 0)) for w in weights]

    out = pl.pallas_call(
        residual_attention_block_kernel,
        out_shape=jax.ShapeDtypeStruct((num_slabs, T, D), x.dtype),
        grid_spec=pltpu.PrefetchScalarGridSpec(
            num_scalar_prefetch=0,
            grid=(num_slabs,),
            in_specs=[slab_spec] + weight_specs,
            out_specs=slab_spec,
        ),
        compiler_params=pltpu.CompilerParams(
            dimension_semantics=("parallel",)),
    )(x3, *weights)

    # TODO(synk): when batching many slabs at real CLIP dims, emit a lane-dense
    # (multiple-of-128) output slab and cast matmul inputs to bf16 (f32 accum).
    return out.reshape(L, N, D)


# ---------- pure-JAX reference (for correctness check) ----------
def reference_block(x, p):
    def ln(v, w, b):
        u = jnp.mean(v, -1, keepdims=True)
        s = jnp.mean((v - u) ** 2, -1, keepdims=True)
        return w * ((v - u) / jnp.sqrt(s + EPS)) + b

    L, N, D = x.shape
    h = ln(x, p['ln1_w'], p['ln1_b'])
    qkv = jnp.einsum('lnd,ed->lne', h, p['in_proj_w']) + p['in_proj_b']
    q, k, v = jnp.split(qkv, 3, axis=-1)
    q = q.reshape(L, N, N_HEAD, HEAD_DIM) * (HEAD_DIM ** -0.5)
    k = k.reshape(L, N, N_HEAD, HEAD_DIM)
    v = v.reshape(L, N, N_HEAD, HEAD_DIM)
    s = jnp.einsum('qnhd,knhd->nhqk', q, k)
    pmat = jax.nn.softmax(s, axis=-1)
    a = jnp.einsum('nhqk,knhd->qnhd', pmat, v).reshape(L, N, D)
    a = jnp.einsum('lnd,ed->lne', a, p['out_proj_w']) + p['out_proj_b']
    x = x + a
    h2 = ln(x, p['ln2_w'], p['ln2_b'])
    fc = jnp.einsum('lnd,fd->lnf', h2, p['c_fc_w']) + p['c_fc_b']
    fc = fc * jax.nn.sigmoid(1.702 * fc)
    pr = jnp.einsum('lnf,df->lnd', fc, p['c_proj_w']) + p['c_proj_b']
    return x + pr


def init_params(key):
    ks = jax.random.split(key, 8)
    w = lambda k, shape: (0.02 * jax.random.normal(k, shape)).astype(jnp.float32)
    return {
        'ln1_w': jnp.ones((D_MODEL,), jnp.float32),
        'ln1_b': jnp.zeros((D_MODEL,), jnp.float32),
        'in_proj_w': w(ks[0], (3 * D_MODEL, D_MODEL)),       # PyTorch (out, in)
        'in_proj_b': w(ks[1], (3 * D_MODEL,)),
        'out_proj_w': w(ks[2], (D_MODEL, D_MODEL)),
        'out_proj_b': w(ks[3], (D_MODEL,)),
        'ln2_w': jnp.ones((D_MODEL,), jnp.float32),
        'ln2_b': jnp.zeros((D_MODEL,), jnp.float32),
        'c_fc_w': w(ks[4], (D_FF, D_MODEL)),
        'c_fc_b': w(ks[5], (D_FF,)),
        'c_proj_w': w(ks[6], (D_MODEL, D_FF)),
        'c_proj_b': w(ks[7], (D_MODEL,)),
    }


if __name__ == "__main__":
    key = jax.random.PRNGKey(0)
    kx, kp_ = jax.random.split(key)
    x = jax.random.normal(kx, (SEQ, BATCH, D_MODEL), dtype=jnp.float32)
    params = init_params(kp_)
    kparams = prepare_params(params)      # one-time parameter prep

    out = residual_attention_block(x, kparams)
    out = jax.block_until_ready(out)

    ref = reference_block(x, params)
    assert out.shape == (SEQ, BATCH, D_MODEL)
    assert jnp.allclose(out, ref, atol=1e-4, rtol=1e-4), "mismatch vs reference"
    print("KERNEL_OK")
</pallas_src>

<mosaic_0001>
module attributes {stable_mosaic.version = 11 : i64} {
  func.func @residual_attention_block_kernel(%arg0: i32, %arg1: memref<1x16x32xf32, #tpu.memory_space<vmem>>, %arg2: memref<1x32xf32, #tpu.memory_space<vmem>>, %arg3: memref<1x32xf32, #tpu.memory_space<vmem>>, %arg4: memref<32x96xf32, #tpu.memory_space<vmem>>, %arg5: memref<1x96xf32, #tpu.memory_space<vmem>>, %arg6: memref<32x32xf32, #tpu.memory_space<vmem>>, %arg7: memref<1x32xf32, #tpu.memory_space<vmem>>, %arg8: memref<1x32xf32, #tpu.memory_space<vmem>>, %arg9: memref<1x32xf32, #tpu.memory_space<vmem>>, %arg10: memref<32x128xf32, #tpu.memory_space<vmem>>, %arg11: memref<1x128xf32, #tpu.memory_space<vmem>>, %arg12: memref<128x32xf32, #tpu.memory_space<vmem>>, %arg13: memref<1x32xf32, #tpu.memory_space<vmem>>, %arg14: memref<1x16x32xf32, #tpu.memory_space<vmem>>) attributes {dimension_semantics = [#tpu.dimension_semantics<parallel>], iteration_bounds = array<i64: 1>, scalar_prefetch = 0 : i64, scratch_operands = 0 : i64, tpu.core_type = #tpu.core_type<tc>, window_params = [{transform_indices = @transform_0, window_bounds = array<i64: 1, 16, 32>}, {pipeline_mode = #tpu.pipeline_mode<synchronous>, transform_indices = @transform_1, window_bounds = array<i64: 1, 32>}, {pipeline_mode = #tpu.pipeline_mode<synchronous>, transform_indices = @transform_2, window_bounds = array<i64: 1, 32>}, {pipeline_mode = #tpu.pipeline_mode<synchronous>, transform_indices = @transform_3, window_bounds = array<i64: 32, 96>}, {pipeline_mode = #tpu.pipeline_mode<synchronous>, transform_indices = @transform_4, window_bounds = array<i64: 1, 96>}, {pipeline_mode = #tpu.pipeline_mode<synchronous>, transform_indices = @transform_5, window_bounds = array<i64: 32, 32>}, {pipeline_mode = #tpu.pipeline_mode<synchronous>, transform_indices = @transform_6, window_bounds = array<i64: 1, 32>}, {pipeline_mode = #tpu.pipeline_mode<synchronous>, transform_indices = @transform_7, window_bounds = array<i64: 1, 32>}, {pipeline_mode = #tpu.pipeline_mode<synchronous>, transform_indices = @transform_8, window_bounds = array<i64: 1, 32>}, {pipeline_mode = #tpu.pipeline_mode<synchronous>, transform_indices = @transform_9, window_bounds = array<i64: 32, 128>}, {pipeline_mode = #tpu.pipeline_mode<synchronous>, transform_indices = @transform_10, window_bounds = array<i64: 1, 128>}, {pipeline_mode = #tpu.pipeline_mode<synchronous>, transform_indices = @transform_11, window_bounds = array<i64: 128, 32>}, {pipeline_mode = #tpu.pipeline_mode<synchronous>, transform_indices = @transform_12, window_bounds = array<i64: 1, 32>}, {transform_indices = @transform_13, window_bounds = array<i64: 1, 16, 32>}]} {
    %c0 = arith.constant 0 : index
    %c0_0 = arith.constant 0 : index
    %c0_1 = arith.constant 0 : index
    %0 = vector.load %arg1[%c0, %c0_0, %c0_1] : memref<1x16x32xf32, #tpu.memory_space<vmem>>, vector<1x16x32xf32>
    %1 = vector.shape_cast %0 : vector<1x16x32xf32> to vector<16x32xf32>
    %c0_2 = arith.constant 0 : index
    %c0_3 = arith.constant 0 : index
    %2 = vector.load %arg2[%c0_2, %c0_3] : memref<1x32xf32, #tpu.memory_space<vmem>>, vector<1x32xf32>
    %c0_4 = arith.constant 0 : index
    %c0_5 = arith.constant 0 : index
    %3 = vector.load %arg3[%c0_4, %c0_5] : memref<1x32xf32, #tpu.memory_space<vmem>>, vector<1x32xf32>
    %cst = arith.constant dense<0.000000e+00> : vector<16xf32>
    %4 = vector.multi_reduction <add>, %1, %cst [1] : vector<16x32xf32> to vector<16xf32>
    %5 = vector.shape_cast %4 : vector<16xf32> to vector<16x1xf32>
    %cst_6 = arith.constant 3.200000e+01 : f32
    %6 = vector.broadcast %cst_6 : f32 to vector<16x1xf32>
    %7 = arith.divf %5, %6 : vector<16x1xf32>
    %8 = vector.broadcast %7 : vector<16x1xf32> to vector<16x32xf32>
    %9 = arith.subf %1, %8 : vector<16x32xf32>
    %10 = arith.mulf %9, %9 : vector<16x32xf32>
    %cst_7 = arith.constant dense<0.000000e+00> : vector<16xf32>
    %11 = vector.multi_reduction <add>, %10, %cst_7 [1] : vector<16x32xf32> to vector<16xf32>
    %12 = vector.shape_cast %11 : vector<16xf32> to vector<16x1xf32>
    %cst_8 = arith.constant 3.200000e+01 : f32
    %13 = vector.broadcast %cst_8 : f32 to vector<16x1xf32>
    %14 = arith.divf %12, %13 : vector<16x1xf32>
    %15 = vector.broadcast %7 : vector<16x1xf32> to vector<16x32xf32>
    %16 = arith.subf %1, %15 : vector<16x32xf32>
    %cst_9 = arith.constant 9.99999996E-13 : f32
    %17 = vector.broadcast %cst_9 : f32 to vector<16x1xf32>
    %18 = arith.addf %14, %17 : vector<16x1xf32>
    %19 = math.rsqrt %18 : vector<16x1xf32>
    %20 = vector.broadcast %19 : vector<16x1xf32> to vector<16x32xf32>
    %21 = arith.mulf %16, %20 : vector<16x32xf32>
    %22 = vector.broadcast %2 : vector<1x32xf32> to vector<16x32xf32>
    %23 = arith.mulf %22, %21 : vector<16x32xf32>
    %24 = vector.broadcast %3 : vector<1x32xf32> to vector<16x32xf32>
    %25 = arith.addf %23, %24 : vector<16x32xf32>
    %c0_10 = arith.constant 0 : index
    %c0_11 = arith.constant 0 : index
    %26 = vector.load %arg4[%c0_10, %c0_11] : memref<32x96xf32, #tpu.memory_space<vmem>>, vector<32x96xf32>
    %cst_12 = arith.constant dense<0.000000e+00> : vector<16x96xf32>
    %27 = tpu.matmul %25, %26, %cst_12 {dimension_numbers = #tpu.dot_dimension_numbers<[1], [0], [0], [1], [0, 0, 1, 1], [], []>} : vector<16x32xf32>, vector<32x96xf32>, vector<16x96xf32> -> vector<16x96xf32>
    %c0_13 = arith.constant 0 : index
    %c0_14 = arith.constant 0 : index
    %28 = vector.load %arg5[%c0_13, %c0_14] : memref<1x96xf32, #tpu.memory_space<vmem>>, vector<1x96xf32>
    %29 = vector.broadcast %28 : vector<1x96xf32> to vector<16x96xf32>
    %30 = arith.addf %27, %29 : vector<16x96xf32>
    %31 = vector.extract_strided_slice %30 {offsets = [0, 0], sizes = [16, 32], strides = [1, 1]} : vector<16x96xf32> to vector<16x32xf32>
    %32 = vector.shape_cast %31 : vector<16x32xf32> to vector<16x4x8xf32>
    %33 = tpu.transpose %32, [1, 0, 2] : vector<16x4x8xf32> -> vector<4x16x8xf32>
    %34 = vector.extract_strided_slice %30 {offsets = [0, 32], sizes = [16, 32], strides = [1, 1]} : vector<16x96xf32> to vector<16x32xf32>
    %35 = vector.shape_cast %34 : vector<16x32xf32> to vector<16x4x8xf32>
    %36 = tpu.transpose %35, [1, 0, 2] : vector<16x4x8xf32> -> vector<4x16x8xf32>
    %37 = vector.extract_strided_slice %30 {offsets = [0, 64], sizes = [16, 32], strides = [1, 1]} : vector<16x96xf32> to vector<16x32xf32>
    %38 = vector.shape_cast %37 : vector<16x32xf32> to vector<16x4x8xf32>
    %39 = tpu.transpose %38, [1, 0, 2] : vector<16x4x8xf32> -> vector<4x16x8xf32>
    %cst_15 = arith.constant dense<0.000000e+00> : vector<4x16x16xf32>
    %40 = tpu.matmul %33, %36, %cst_15 {dimension_numbers = #tpu.dot_dimension_numbers<[2], [2], [1], [1], [0, 0, 0, 1, 1, 1], [0], [0]>} : vector<4x16x8xf32>, vector<4x16x8xf32>, vector<4x16x16xf32> -> vector<4x16x16xf32>
    %41 = tpu.iota {dimensions = array<i32: 0>} : vector<16x16xi32>
    %42 = tpu.iota {dimensions = array<i32: 1>} : vector<16x16xi32>
    %c2_i32 = arith.constant 2 : i32
    %c0_i32 = arith.constant 0 : i32
    %43 = arith.cmpi eq, %c2_i32, %c0_i32 : i32
    %c1_i32 = arith.constant 1 : i32
    %44 = arith.select %43, %c1_i32, %c2_i32 : i32
    %45 = vector.broadcast %44 : i32 to vector<16x16xi32>
    %46 = arith.remsi %41, %45 : vector<16x16xi32>
    %c0_i32_16 = arith.constant 0 : i32
    %47 = vector.broadcast %c0_i32_16 : i32 to vector<16x16xi32>
    %48 = arith.cmpi ne, %46, %47 : vector<16x16xi32>
    %c0_i32_17 = arith.constant 0 : i32
    %49 = vector.broadcast %c0_i32_17 : i32 to vector<16x16xi32>
    %50 = arith.cmpi slt, %46, %49 : vector<16x16xi32>
    %c0_i32_18 = arith.constant 0 : i32
    %51 = arith.cmpi slt, %44, %c0_i32_18 : i32
    %52 = vector.broadcast %51 : i1 to vector<16x16xi1>
    %53 = vector.broadcast %52 : vector<16x16xi1> to vector<16x16xi1>
    %54 = arith.xori %50, %53 : vector<16x16xi1>
    %55 = arith.andi %54, %48 : vector<16x16xi1>
    %56 = vector.broadcast %44 : i32 to vector<16x16xi32>
    %57 = arith.addi %46, %56 : vector<16x16xi32>
    %58 = arith.select %55, %57, %46 : vector<16x16xi1>, vector<16x16xi32>
    %c2_i32_19 = arith.constant 2 : i32
    %c0_i32_20 = arith.constant 0 : i32
    %59 = arith.cmpi eq, %c2_i32_19, %c0_i32_20 : i32
    %c1_i32_21 = arith.constant 1 : i32
    %60 = arith.select %59, %c1_i32_21, %c2_i32_19 : i32
    %61 = vector.broadcast %60 : i32 to vector<16x16xi32>
    %62 = arith.remsi %42, %61 : vector<16x16xi32>
    %c0_i32_22 = arith.constant 0 : i32
    %63 = vector.broadcast %c0_i32_22 : i32 to vector<16x16xi32>
    %64 = arith.cmpi ne, %62, %63 : vector<16x16xi32>
    %c0_i32_23 = arith.constant 0 : i32
    %65 = vector.broadcast %c0_i32_23 : i32 to vector<16x16xi32>
    %66 = arith.cmpi slt, %62, %65 : vector<16x16xi32>
    %c0_i32_24 = arith.constant 0 : i32
    %67 = arith.cmpi slt, %60, %c0_i32_24 : i32
    %68 = vector.broadcast %67 : i1 to vector<16x16xi1>
    %69 = vector.broadcast %68 : vector<16x16xi1> to vector<16x16xi1>
    %70 = arith.xori %66, %69 : vector<16x16xi1>
    %71 = arith.andi %70, %64 : vector<16x16xi1>
    %72 = vector.broadcast %60 : i32 to vector<16x16xi32>
    %73 = arith.addi %62, %72 : vector<16x16xi32>
    %74 = arith.select %71, %73, %62 : vector<16x16xi1>, vector<16x16xi32>
    %75 = arith.cmpi eq, %58, %74 : vector<16x16xi32>
    %76 = vector.shape_cast %75 : vector<16x16xi1> to vector<1x16x16xi1>
    %77 = vector.shape_cast %76 : vector<1x16x16xi1> to vector<1x16x16xi1>
    %78 = vector.broadcast %77 : vector<1x16x16xi1> to vector<4x16x16xi1>
    %cst_25 = arith.constant -1.000000e+30 : f32
    %79 = vector.broadcast %cst_25 : f32 to vector<4x16x16xf32>
    %80 = arith.select %78, %40, %79 : vector<4x16x16xi1>, vector<4x16x16xf32>
    %cst_26 = arith.constant dense<0xFF800000> : vector<4x16xf32>
    %81 = vector.multi_reduction <maximumf>, %80, %cst_26 [2] : vector<4x16x16xf32> to vector<4x16xf32>
    %82 = vector.shape_cast %81 : vector<4x16xf32> to vector<4x16x1xf32>
    %83 = vector.broadcast %82 : vector<4x16x1xf32> to vector<4x16x16xf32>
    %84 = arith.subf %80, %83 : vector<4x16x16xf32>
    %85 = math.exp %84 : vector<4x16x16xf32>
    %cst_27 = arith.constant dense<0.000000e+00> : vector<4x16xf32>
    %86 = vector.multi_reduction <add>, %85, %cst_27 [2] : vector<4x16x16xf32> to vector<4x16xf32>
    %87 = vector.shape_cast %86 : vector<4x16xf32> to vector<4x16x1xf32>
    %88 = vector.broadcast %87 : vector<4x16x1xf32> to vector<4x16x16xf32>
    %89 = arith.divf %85, %88 : vector<4x16x16xf32>
    %cst_28 = arith.constant dense<0.000000e+00> : vector<4x16x8xf32>
    %90 = tpu.matmul %89, %39, %cst_28 {dimension_numbers = #tpu.dot_dimension_numbers<[2], [1], [1], [2], [0, 0, 0, 1, 1, 2], [0], [0]>} : vector<4x16x16xf32>, vector<4x16x8xf32>, vector<4x16x8xf32> -> vector<4x16x8xf32>
    %91 = tpu.transpose %90, [1, 0, 2] : vector<4x16x8xf32> -> vector<16x4x8xf32>
    %92 = vector.shape_cast %91 : vector<16x4x8xf32> to vector<16x32xf32>
    %c0_29 = arith.constant 0 : index
    %c0_30 = arith.constant 0 : index
    %93 = vector.load %arg6[%c0_29, %c0_30] : memref<32x32xf32, #tpu.memory_space<vmem>>, vector<32x32xf32>
    %cst_31 = arith.constant dense<0.000000e+00> : vector<16x32xf32>
    %94 = tpu.matmul %92, %93, %cst_31 {dimension_numbers = #tpu.dot_dimension_numbers<[1], [0], [0], [1], [0, 0, 1, 1], [], []>} : vector<16x32xf32>, vector<32x32xf32>, vector<16x32xf32> -> vector<16x32xf32>
    %c0_32 = arith.constant 0 : index
    %c0_33 = arith.constant 0 : index
    %95 = vector.load %arg7[%c0_32, %c0_33] : memref<1x32xf32, #tpu.memory_space<vmem>>, vector<1x32xf32>
    %96 = vector.broadcast %95 : vector<1x32xf32> to vector<16x32xf32>
    %97 = arith.addf %94, %96 : vector<16x32xf32>
    %98 = arith.addf %1, %97 : vector<16x32xf32>
    %c0_34 = arith.constant 0 : index
    %c0_35 = arith.constant 0 : index
    %99 = vector.load %arg8[%c0_34, %c0_35] : memref<1x32xf32, #tpu.memory_space<vmem>>, vector<1x32xf32>
    %c0_36 = arith.constant 0 : index
    %c0_37 = arith.constant 0 : index
    %100 = vector.load %arg9[%c0_36, %c0_37] : memref<1x32xf32, #tpu.memory_space<vmem>>, vector<1x32xf32>
    %cst_38 = arith.constant dense<0.000000e+00> : vector<16xf32>
    %101 = vector.multi_reduction <add>, %98, %cst_38 [1] : vector<16x32xf32> to vector<16xf32>
    %102 = vector.shape_cast %101 : vector<16xf32> to vector<16x1xf32>
    %cst_39 = arith.constant 3.200000e+01 : f32
    %103 = vector.broadcast %cst_39 : f32 to vector<16x1xf32>
    %104 = arith.divf %102, %103 : vector<16x1xf32>
    %105 = vector.broadcast %104 : vector<16x1xf32> to vector<16x32xf32>
    %106 = arith.subf %98, %105 : vector<16x32xf32>
    %107 = arith.mulf %106, %106 : vector<16x32xf32>
    %cst_40 = arith.constant dense<0.000000e+00> : vector<16xf32>
    %108 = vector.multi_reduction <add>, %107, %cst_40 [1] : vector<16x32xf32> to vector<16xf32>
    %109 = vector.shape_cast %108 : vector<16xf32> to vector<16x1xf32>
    %cst_41 = arith.constant 3.200000e+01 : f32
    %110 = vector.broadcast %cst_41 : f32 to vector<16x1xf32>
    %111 = arith.divf %109, %110 : vector<16x1xf32>
    %112 = vector.broadcast %104 : vector<16x1xf32> to vector<16x32xf32>
    %113 = arith.subf %98, %112 : vector<16x32xf32>
    %cst_42 = arith.constant 9.99999996E-13 : f32
    %114 = vector.broadcast %cst_42 : f32 to vector<16x1xf32>
    %115 = arith.addf %111, %114 : vector<16x1xf32>
    %116 = math.rsqrt %115 : vector<16x1xf32>
    %117 = vector.broadcast %116 : vector<16x1xf32> to vector<16x32xf32>
    %118 = arith.mulf %113, %117 : vector<16x32xf32>
    %119 = vector.broadcast %99 : vector<1x32xf32> to vector<16x32xf32>
    %120 = arith.mulf %119, %118 : vector<16x32xf32>
    %121 = vector.broadcast %100 : vector<1x32xf32> to vector<16x32xf32>
    %122 = arith.addf %120, %121 : vector<16x32xf32>
    %c0_43 = arith.constant 0 : index
    %c0_44 = arith.constant 0 : index
    %123 = vector.load %arg10[%c0_43, %c0_44] : memref<32x128xf32, #tpu.memory_space<vmem>>, vector<32x128xf32>
    %cst_45 = arith.constant dense<0.000000e+00> : vector<16x128xf32>
    %124 = tpu.matmul %122, %123, %cst_45 {dimension_numbers = #tpu.dot_dimension_numbers<[1], [0], [0], [1], [0, 0, 1, 1], [], []>} : vector<16x32xf32>, vector<32x128xf32>, vector<16x128xf32> -> vector<16x128xf32>
    %c0_46 = arith.constant 0 : index
    %c0_47 = arith.constant 0 : index
    %125 = vector.load %arg11[%c0_46, %c0_47] : memref<1x128xf32, #tpu.memory_space<vmem>>, vector<1x128xf32>
    %126 = vector.broadcast %125 : vector<1x128xf32> to vector<16x128xf32>
    %127 = arith.addf %124, %126 : vector<16x128xf32>
    %cst_48 = arith.constant 1.702000e+00 : f32
    %128 = vector.broadcast %cst_48 : f32 to vector<16x128xf32>
    %129 = arith.mulf %128, %127 : vector<16x128xf32>
    %130 = arith.negf %129 : vector<16x128xf32>
    %131 = math.exp %130 : vector<16x128xf32>
    %cst_49 = arith.constant 1.000000e+00 : f32
    %132 = vector.broadcast %cst_49 : f32 to vector<16x128xf32>
    %133 = arith.addf %132, %131 : vector<16x128xf32>
    %134 = arith.divf %132, %133 : vector<16x128xf32>
    %135 = arith.mulf %127, %134 : vector<16x128xf32>
    %c0_50 = arith.constant 0 : index
    %c0_51 = arith.constant 0 : index
    %136 = vector.load %arg12[%c0_50, %c0_51] : memref<128x32xf32, #tpu.memory_space<vmem>>, vector<128x32xf32>
    %cst_52 = arith.constant dense<0.000000e+00> : vector<16x32xf32>
    %137 = tpu.matmul %135, %136, %cst_52 {dimension_numbers = #tpu.dot_dimension_numbers<[1], [0], [0], [1], [0, 0, 1, 1], [], []>} : vector<16x128xf32>, vector<128x32xf32>, vector<16x32xf32> -> vector<16x32xf32>
    %c0_53 = arith.constant 0 : index
    %c0_54 = arith.constant 0 : index
    %138 = vector.load %arg13[%c0_53, %c0_54] : memref<1x32xf32, #tpu.memory_space<vmem>>, vector<1x32xf32>
    %139 = vector.broadcast %138 : vector<1x32xf32> to vector<16x32xf32>
    %140 = arith.addf %137, %139 : vector<16x32xf32>
    %141 = arith.addf %98, %140 : vector<16x32xf32>
    %c0_55 = arith.constant 0 : index
    %c0_56 = arith.constant 0 : index
    %c0_57 = arith.constant 0 : index
    %142 = vector.load %arg14[%c0_55, %c0_56, %c0_57] : memref<1x16x32xf32, #tpu.memory_space<vmem>>, vector<1x16x32xf32>
    %143 = vector.shape_cast %142 : vector<1x16x32xf32> to vector<16x32xf32>
    %144 = vector.shape_cast %141 : vector<16x32xf32> to vector<1x16x32xf32>
    tpu.vector_store %arg14[%c0_55, %c0_56, %c0_57], %144 {strides = array<i32>} : memref<1x16x32xf32, #tpu.memory_space<vmem>>, vector<1x16x32xf32>,
    return
  }
  func.func @transform_0(%arg0: i32) -> (i32, i32, i32) {
    %c0_i32 = arith.constant 0 : i32
    %c0_i32_0 = arith.constant 0 : i32
    %c0_i32_1 = arith.constant 0 : i32
    return %arg0, %c0_i32, %c0_i32_0 : i32, i32, i32
  }
  func.func @transform_1(%arg0: i32) -> (i32, i32) {
    %c0_i32 = arith.constant 0 : i32
    %c0_i32_0 = arith.constant 0 : i32
    %c0_i32_1 = arith.constant 0 : i32
    return %c0_i32, %c0_i32_0 : i32, i32
  }
  func.func @transform_2(%arg0: i32) -> (i32, i32) {
    %c0_i32 = arith.constant 0 : i32
    %c0_i32_0 = arith.constant 0 : i32
    %c0_i32_1 = arith.constant 0 : i32
    return %c0_i32, %c0_i32_0 : i32, i32
  }
  func.func @transform_3(%arg0: i32) -> (i32, i32) {
    %c0_i32 = arith.constant 0 : i32
    %c0_i32_0 = arith.constant 0 : i32
    %c0_i32_1 = arith.constant 0 : i32
    return %c0_i32, %c0_i32_0 : i32, i32
  }
  func.func @transform_4(%arg0: i32) -> (i32, i32) {
    %c0_i32 = arith.constant 0 : i32
    %c0_i32_0 = arith.constant 0 : i32
    %c0_i32_1 = arith.constant 0 : i32
    return %c0_i32, %c0_i32_0 : i32, i32
  }
  func.func @transform_5(%arg0: i32) -> (i32, i32) {
    %c0_i32 = arith.constant 0 : i32
    %c0_i32_0 = arith.constant 0 : i32
    %c0_i32_1 = arith.constant 0 : i32
    return %c0_i32, %c0_i32_0 : i32, i32
  }
  func.func @transform_6(%arg0: i32) -> (i32, i32) {
    %c0_i32 = arith.constant 0 : i32
    %c0_i32_0 = arith.constant 0 : i32
    %c0_i32_1 = arith.constant 0 : i32
    return %c0_i32, %c0_i32_0 : i32, i32
  }
  func.func @transform_7(%arg0: i32) -> (i32, i32) {
    %c0_i32 = arith.constant 0 : i32
    %c0_i32_0 = arith.constant 0 : i32
    %c0_i32_1 = arith.constant 0 : i32
    return %c0_i32, %c0_i32_0 : i32, i32
  }
  func.func @transform_8(%arg0: i32) -> (i32, i32) {
    %c0_i32 = arith.constant 0 : i32
    %c0_i32_0 = arith.constant 0 : i32
    %c0_i32_1 = arith.constant 0 : i32
    return %c0_i32, %c0_i32_0 : i32, i32
  }
  func.func @transform_9(%arg0: i32) -> (i32, i32) {
    %c0_i32 = arith.constant 0 : i32
    %c0_i32_0 = arith.constant 0 : i32
    %c0_i32_1 = arith.constant 0 : i32
    return %c0_i32, %c0_i32_0 : i32, i32
  }
  func.func @transform_10(%arg0: i32) -> (i32, i32) {
    %c0_i32 = arith.constant 0 : i32
    %c0_i32_0 = arith.constant 0 : i32
    %c0_i32_1 = arith.constant 0 : i32
    return %c0_i32, %c0_i32_0 : i32, i32
  }
  func.func @transform_11(%arg0: i32) -> (i32, i32) {
    %c0_i32 = arith.constant 0 : i32
    %c0_i32_0 = arith.constant 0 : i32
    %c0_i32_1 = arith.constant 0 : i32
    return %c0_i32, %c0_i32_0 : i32, i32
  }
  func.func @transform_12(%arg0: i32) -> (i32, i32) {
    %c0_i32 = arith.constant 0 : i32
    %c0_i32_0 = arith.constant 0 : i32
    %c0_i32_1 = arith.constant 0 : i32
    return %c0_i32, %c0_i32_0 : i32, i32
  }
  func.func @transform_13(%arg0: i32) -> (i32, i32, i32) {
    %c0_i32 = arith.constant 0 : i32
    %c0_i32_0 = arith.constant 0 : i32
    %c0_i32_1 = arith.constant 0 : i32
    return %arg0, %c0_i32, %c0_i32_0 : i32, i32, i32
  }
}

</mosaic_0001>

<llo_original>
// kernel: tpu_custom_call.1
$region0: #{tpu_custom_call.1}
  #allocation0 [shape = 'u32[]', space=smem, size = 0x4, offset = 0x4, fixed_abs, tag = 'smem constant byte address 0x4 - core index']
  #allocation1 [shape = 'u32[144,128]{1,0:T(1,128)}', space=vmem, size = 0x12000, scoped, tag = 'internal scratch']
  %s0 = inlined_call_operand.vmem [shape: f32[1,16,32], index: 0, kind: input, shape index: {}]
  %s1 = inlined_call_operand.vmem [shape: f32[1,32], index: 1, kind: input, shape index: {}]
  %s2 = inlined_call_operand.vmem [shape: f32[1,32], index: 2, kind: input, shape index: {}]
  %s3 = inlined_call_operand.vmem [shape: f32[32,96], index: 3, kind: input, shape index: {}]
  %s4 = inlined_call_operand.vmem [shape: f32[1,96], index: 4, kind: input, shape index: {}]
  %s5 = inlined_call_operand.vmem [shape: f32[32,32], index: 5, kind: input, shape index: {}]
  %s6 = inlined_call_operand.vmem [shape: f32[1,32], index: 6, kind: input, shape index: {}]
  %s7 = inlined_call_operand.vmem [shape: f32[1,32], index: 7, kind: input, shape index: {}]
  %s8 = inlined_call_operand.vmem [shape: f32[1,32], index: 8, kind: input, shape index: {}]
  %s9 = inlined_call_operand.vmem [shape: f32[32,128], index: 9, kind: input, shape index: {}]
  %s10 = inlined_call_operand.vmem [shape: f32[1,128], index: 10, kind: input, shape index: {}]
  %s11 = inlined_call_operand.vmem [shape: f32[128,32], index: 11, kind: input, shape index: {}]
  %s12 = inlined_call_operand.vmem [shape: f32[1,32], index: 12, kind: input, shape index: {}]
  %s13 = inlined_call_operand.hbm [shape: f32[1,16,32], index: 13, kind: output, shape index: {}]
  %s14 = sld [smem:[#allocation0]]
  $region62: #{tpu_custom_call.1} parent=0
    _
  %s16 = ssub.s32 1, %s14
  %s17 = scalar_select 0, %s16, %s14
  $region1: #{tpu_custom_call.1} parent=0
    #allocation2 [shape = 'u8[8192]{0}', space=vmem, size = 0x2000, scoped, tag = 'output window, operand 0, single buffered']
    #allocation3 [shape = 's32[1]{0}', space=sflag, size = 0x4, scoped, tag = 'scoped memory for tpu_custom_call.1']
    %18 = vsyncpa [#allocation3], 0
    // Predicated region
    $region2: #{tpu_custom_call.1} parent=1 // pred_check
      _
    $region3: #{tpu_custom_call.1} parent=1 // pred_check_branch
      %20 = sbr.rel (0) target = $region5
    $region4: #{tpu_custom_call.1} parent=1 // pred_region
      _
    $region5: #{tpu_custom_call.1} parent=1 // pred_fallthru
      _
    // Predicated region
    $region6: #{tpu_custom_call.1} parent=1 // pred_check
      _
    $region7: #{tpu_custom_call.1} parent=1 // pred_check_branch
      %22 = sbr.rel (0) target = $region9
    $region8: #{tpu_custom_call.1} parent=1 // pred_region
      _
    $region9: #{tpu_custom_call.1} parent=1 // pred_fallthru
      _
    // Predicated region
    $region10: #{tpu_custom_call.1} parent=1 // pred_check
      _
    $region11: #{tpu_custom_call.1} parent=1 // pred_check_branch
      %24 = sbr.rel (0) target = $region13
    $region12: #{tpu_custom_call.1} parent=1 // pred_region
      _
    $region13: #{tpu_custom_call.1} parent=1 // pred_fallthru
      _
    // Predicated region
    $region14: #{tpu_custom_call.1} parent=1 // pred_check
      _
    $region15: #{tpu_custom_call.1} parent=1 // pred_check_branch
      %26 = sbr.rel (0) target = $region17
    $region16: #{tpu_custom_call.1} parent=1 // pred_region
      _
    $region17: #{tpu_custom_call.1} parent=1 // pred_fallthru
      _
    // Predicated region
    $region18: #{tpu_custom_call.1} parent=1 // pred_check
      _
    $region19: #{tpu_custom_call.1} parent=1 // pred_check_branch
      %28 = sbr.rel (0) target = $region21
    $region20: #{tpu_custom_call.1} parent=1 // pred_region
      _
    $region21: #{tpu_custom_call.1} parent=1 // pred_fallthru
      _
    // Predicated region
    $region22: #{tpu_custom_call.1} parent=1 // pred_check
      _
    $region23: #{tpu_custom_call.1} parent=1 // pred_check_branch
      %30 = sbr.rel (0) target = $region25
    $region24: #{tpu_custom_call.1} parent=1 // pred_region
      _
    $region25: #{tpu_custom_call.1} parent=1 // pred_fallthru
      _
    // Predicated region
    $region26: #{tpu_custom_call.1} parent=1 // pred_check
      _
    $region27: #{tpu_custom_call.1} parent=1 // pred_check_branch
      %32 = sbr.rel (0) target = $region29
    $region28: #{tpu_custom_call.1} parent=1 // pred_region
      _
    $region29: #{tpu_custom_call.1} parent=1 // pred_fallthru
      _
    // Predicated region
    $region30: #{tpu_custom_call.1} parent=1 // pred_check
      _
    $region31: #{tpu_custom_call.1} parent=1 // pred_check_branch
      %34 = sbr.rel (0) target = $region33
    $region32: #{tpu_custom_call.1} parent=1 // pred_region
      _
    $region33: #{tpu_custom_call.1} parent=1 // pred_fallthru
      _
    // Predicated region
    $region34: #{tpu_custom_call.1} parent=1 // pred_check
      _
    $region35: #{tpu_custom_call.1} parent=1 // pred_check_branch
      %36 = sbr.rel (0) target = $region37
    $region36: #{tpu_custom_call.1} parent=1 // pred_region
      _
    $region37: #{tpu_custom_call.1} parent=1 // pred_fallthru
      _
    // Predicated region
    $region38: #{tpu_custom_call.1} parent=1 // pred_check
      _
    $region39: #{tpu_custom_call.1} parent=1 // pred_check_branch
      %38 = sbr.rel (0) target = $region41
    $region40: #{tpu_custom_call.1} parent=1 // pred_region
      _
    $region41: #{tpu_custom_call.1} parent=1 // pred_fallthru
      _
    // Predicated region
    $region42: #{tpu_custom_call.1} parent=1 // pred_check
      _
    $region43: #{tpu_custom_call.1} parent=1 // pred_check_branch
      %40 = sbr.rel (0) target = $region45
    $region44: #{tpu_custom_call.1} parent=1 // pred_region
      _
    $region45: #{tpu_custom_call.1} parent=1 // pred_fallthru
      _
    // Predicated region
    $region46: #{tpu_custom_call.1} parent=1 // pred_check
      _
    $region47: #{tpu_custom_call.1} parent=1 // pred_check_branch
      %42 = sbr.rel (0) target = $region49
    $region48: #{tpu_custom_call.1} parent=1 // pred_region
      _
    $region49: #{tpu_custom_call.1} parent=1 // pred_fallthru
      _
    // Predicated region
    $region50: #{tpu_custom_call.1} parent=1 // pred_check
      _
    $region51: #{tpu_custom_call.1} parent=1 // pred_check_branch
      %44 = sbr.rel (0) target = $region53
    $region52: #{tpu_custom_call.1} parent=1 // pred_region
      _
    $region53: #{tpu_custom_call.1} parent=1 // pred_fallthru
      _
    %v45 = vld [vmem:[%s0] sm:$0xff]
    %v46 = vld [vmem:[%s0 + $0x8] sm:$0xff]
    %v47 = vld [vmem:[%s1] sm:$0x1]
    %v48 = vld [vmem:[%s2] sm:$0x1]
    %vm49 = vcmask 261120
    %v50 = vsel %vm49, %v45, 0.0
    %51 = vadd.xlane.f32.xlu0 %v50
    %v52 = vpop.xlane.xlu0 %51
    %v53 = vsel %vm49, %v46, 0.0
    %54 = vadd.xlane.f32.xlu0 %v53
    %v55 = vpop.xlane.xlu0 %54
    %v56 = vrcp.pop 32.0
    %v57 = vmul.f32 %v52, %v56
    %v58 = vmul.f32 %v55, %v56
    %v59 = vsub.f32 %v45, %v57
    %v60 = vsub.f32 %v46, %v58
    %v61 = vmul.f32 %v59, %v59
    %v62 = vmul.f32 %v60, %v60
    %v63 = vsel %vm49, %v61, 0.0
    %64 = vadd.xlane.f32.xlu0 %v63
    %v65 = vpop.xlane.xlu0 %64
    %v66 = vsel %vm49, %v62, 0.0
    %67 = vadd.xlane.f32.xlu0 %v66
    %v68 = vpop.xlane.xlu0 %67
    %v69 = vmul.f32 %v65, %v56
    %v70 = vmul.f32 %v68, %v56
    %v71 = vadd.f32 %v69, 1e-12
    %v72 = vadd.f32 %v70, 1e-12
    %v73 = vrsqrt.pop %v71
    %v74 = vrsqrt.pop %v72
    %v75 = vmul.f32 %v59, %v73
    %v76 = vmul.f32 %v60, %v74
    %v78 = vlaneseq
    %v79 = vshrl.u32 %v78, 7
    %v80 = vsub.s32 0, %v79
    %v81 = vrot.slane %v47, %v80
    %v83 = vmul.f32 %v81, %v75
    %v84 = vmul.f32 %v81, %v76
    %v86 = vlaneseq
    %v87 = vshrl.u32 %v86, 7
    %v88 = vsub.s32 0, %v87
    %v89 = vrot.slane %v48, %v88
    %v91 = vadd.f32 %v83, %v89
    %v92 = vadd.f32 %v84, %v89
    %v93 = vld [vmem:[%s3] sm:$0xff]
    %v94 = vld [vmem:[%s3 + $0x8] sm:$0xff]
    %v95 = vld [vmem:[%s3 + $0x10] sm:$0xff]
    %v96 = vld [vmem:[%s3 + $0x18] sm:$0xff]
    %v97 = vld [vmem:[%s4] sm:$0x1]
    %v99 = vlaneseq
    %v100 = vshrl.u32 %v99, 7
    %v101 = vsub.s32 0, %v100
    %v102 = vrot.slane %v97, %v101
    %v105 = vsel %vm49, %v91, 0
    %v108 = vsel %vm49, %v92, 0
    %110 = vmatprep.subr.mxu0 0.0
    %111 = vmatpush1.msra.mxu0 %v93
    %112 = vmatprep.subr.mxu0 0.0
    %113 = vmatpush1.msra.mxu0 %v94
    %114 = vmatprep.subr.mxu0 0.0
    %115 = vmatpush1.msra.mxu0 %v95
    %116 = vmatprep.subr.mxu0 0.0
    %117 = vmatpush1.msra.mxu0 %v96
    %118 = vmatprep.subr.mxu0 0.0
    %119 = vmatpush1.msra.mxu0 0.0
    %120 = vmatprep.subr.mxu0 0.0
    %121 = vmatpush1.msra.mxu0 0.0
    %122 = vmatprep.subr.mxu0 0.0
    %123 = vmatpush1.msra.mxu0 0.0
    %124 = vmatprep.subr.mxu0 0.0
    %125 = vmatpush1.msra.mxu0 0.0
    %126 = vmatprep.subr.mxu0 0.0
    %127 = vmatpush1.msra.mxu0 0.0
    %128 = vmatprep.subr.mxu0 0.0
    %129 = vmatpush1.msra.mxu0 0.0
    %130 = vmatprep.subr.mxu0 0.0
    %131 = vmatpush1.msra.mxu0 0.0
    %132 = vmatprep.subr.mxu0 0.0
    %133 = vmatpush1.msra.mxu0 0.0
    %134 = vmatprep.subr.mxu0 0.0
    %135 = vmatpush1.msra.mxu0 0.0
    %136 = vmatprep.subr.mxu0 0.0
    %137 = vmatpush1.msra.mxu0 0.0
    %138 = vmatprep.subr.mxu0 0.0
    %139 = vmatpush1.msra.mxu0 0.0
    %140 = vmatprep.subr.mxu0 0.0
    %141 = vmatpush1.msra.mxu0 0.0
    %142 = vmatprep.subr.mxu0 0.0
    %143 = vmatpush1.msra.mxu0 0.0
    %144 = vmatprep.subr.mxu0 0.0
    %145 = vmatpush1.msra.mxu0 0.0
    %146 = vmatprep.subr.mxu0 0.0
    %147 = vmatpush1.msra.mxu0 0.0
    %148 = vmatprep.subr.mxu0 0.0
    %149 = vmatpush1.msra.mxu0 0.0
    %150 = vmatprep.subr.mxu0 0.0
    %151 = vmatpush1.msra.mxu0 0.0
    %152 = vmatprep.subr.mxu0 0.0
    %153 = vmatpush1.msra.mxu0 0.0
    %154 = vmatprep.subr.mxu0 0.0
    %155 = vmatpush1.msra.mxu0 0.0
    %156 = vmatprep.subr.mxu0 0.0
    %157 = vmatpush1.msra.mxu0 0.0
    %158 = vmatprep.subr.mxu0 0.0
    %159 = vmatpush1.msra.mxu0 0.0
    %160 = vmatprep.subr.mxu0 0.0
    %161 = vmatpush1.msra.mxu0 0.0
    %162 = vmatprep.subr.mxu0 0.0
    %163 = vmatpush1.msra.mxu0 0.0
    %164 = vmatprep.subr.mxu0 0.0
    %165 = vmatpush1.msra.mxu0 0.0
    %166 = vmatprep.subr.mxu0 0.0
    %167 = vmatpush1.msra.mxu0 0.0
    %168 = vmatprep.subr.mxu0 0.0
    %169 = vmatpush1.msra.mxu0 0.0
    %170 = vmatprep.subr.mxu0 0.0
    %171 = vmatpush1.msra.mxu0 0.0
    %172 = vmatprep.subr.mxu0 0.0
    %173 = vmatpush1.msra.mxu0 0.0
    %174 = vmatprep.mubr.f32.mxu0 0.0
    %175 = vmatmul.mubr.f32.gmra.mrb[0].mxu0 %v105
    %v176 = vpop.f32.mrb[0].mxu0
    %v177 = vadd.f32 %v102, %v176
    %v178 = vpop.f32.mrb[0].mxu0
    %179 = vmatprep.mubr.f32.mxu0 0.0
    %180 = vmatmul.mubr.f32.gmra.mrb[0].mxu0 %v108
    %v181 = vpop.f32.mrb[0].mxu0
    %v182 = vadd.f32 %v102, %v181
    %v183 = vpop.f32.mrb[0].mxu0
    %184 = vdwg.mxu0
    %187 = vrot.lane.b32.xlu0 %v177, 120
    %v188 = vpop.permute.xlu0 %187
    %189 = vrot.lane.b32.xlu0 %v182, 120
    %v190 = vpop.permute.xlu0 %189
    %193 = vrot.lane.b32.xlu0 %v177, 112
    %v194 = vpop.permute.xlu0 %193
    %195 = vrot.lane.b32.xlu0 %v182, 112
    %v196 = vpop.permute.xlu0 %195
    %199 = vrot.lane.b32.xlu0 %v177, 104
    %v200 = vpop.permute.xlu0 %199
    %201 = vrot.lane.b32.xlu0 %v182, 104
    %v202 = vpop.permute.xlu0 %201
    %v205 = vcombine.low %v177, %v194
    %v206 = vcombine.high %v177, %v194
    %v208 = vunpack.c.l.s4 1983009808
    %v209 = vunpack.c.0.s8 %v208
    %v210 = vlaneseq
    %v211 = vshrl.u32 %v210, 7
    %v212 = vsub.s32 %v209, %v211
    %v213 = vrot.slane %v205, %v212
    %v215 = vunpack.c.l.s4 1983009808
    %v216 = vunpack.c.0.s8 %v215
    %v217 = vlaneseq
    %v218 = vshrl.u32 %v217, 7
    %v219 = vsub.s32 %v216, %v218
    %v220 = vrot.slane %v206, %v219
    %v221 = vcombine.low %v188, %v200
    %v222 = vcombine.high %v188, %v200
    %v224 = vunpack.c.l.s4 1983009808
    %v225 = vunpack.c.0.s8 %v224
    %v226 = vlaneseq
    %v227 = vshrl.u32 %v226, 7
    %v228 = vsub.s32 %v225, %v227
    %v229 = vrot.slane %v221, %v228
    %v231 = vunpack.c.l.s4 1983009808
    %v232 = vunpack.c.0.s8 %v231
    %v233 = vlaneseq
    %v234 = vshrl.u32 %v233, 7
    %v235 = vsub.s32 %v232, %v234
    %v236 = vrot.slane %v222, %v235
    %v237 = vcombine.low %v213, %v229
    %v238 = vcombine.high %v213, %v229
    %v240 = vunpack.c.l.s4 1934713408
    %v241 = vunpack.c.0.s8 %v240
    %v242 = vlaneseq
    %v243 = vshrl.u32 %v242, 7
    %v244 = vsub.s32 %v241, %v243
    %v245 = vrot.slane %v237, %v244
    %v247 = vunpack.c.l.s4 1934713408
    %v248 = vunpack.c.0.s8 %v247
    %v249 = vlaneseq
    %v250 = vshrl.u32 %v249, 7
    %v251 = vsub.s32 %v248, %v250
    %v252 = vrot.slane %v238, %v251
    %v253 = vcombine.low %v220, %v236
    %v254 = vcombine.high %v220, %v236
    %v256 = vunpack.c.l.s4 1934713408
    %v257 = vunpack.c.0.s8 %v256
    %v258 = vlaneseq
    %v259 = vshrl.u32 %v258, 7
    %v260 = vsub.s32 %v257, %v259
    %v261 = vrot.slane %v253, %v260
    %v263 = vunpack.c.l.s4 1934713408
    %v264 = vunpack.c.0.s8 %v263
    %v265 = vlaneseq
    %v266 = vshrl.u32 %v265, 7
    %v267 = vsub.s32 %v264, %v266
    %v268 = vrot.slane %v254, %v267
    %v269 = vcombine.high %v245, 0.0
    %v270 = vcombine.high %v252, 0.0
    %v271 = vcombine.high %v261, 0.0
    %v272 = vcombine.high %v268, 0.0
    %v273 = vcombine.low %v182, %v196
    %v274 = vcombine.high %v182, %v196
    %v276 = vunpack.c.l.s4 1983009808
    %v277 = vunpack.c.0.s8 %v276
    %v278 = vlaneseq
    %v279 = vshrl.u32 %v278, 7
    %v280 = vsub.s32 %v277, %v279
    %v281 = vrot.slane %v273, %v280
    %v283 = vunpack.c.l.s4 1983009808
    %v284 = vunpack.c.0.s8 %v283
    %v285 = vlaneseq
    %v286 = vshrl.u32 %v285, 7
    %v287 = vsub.s32 %v284, %v286
    %v288 = vrot.slane %v274, %v287
    %v289 = vcombine.low %v190, %v202
    %v290 = vcombine.high %v190, %v202
    %v292 = vunpack.c.l.s4 1983009808
    %v293 = vunpack.c.0.s8 %v292
    %v294 = vlaneseq
    %v295 = vshrl.u32 %v294, 7
    %v296 = vsub.s32 %v293, %v295
    %v297 = vrot.slane %v289, %v296
    %v299 = vunpack.c.l.s4 1983009808
    %v300 = vunpack.c.0.s8 %v299
    %v301 = vlaneseq
    %v302 = vshrl.u32 %v301, 7
    %v303 = vsub.s32 %v300, %v302
    %v304 = vrot.slane %v290, %v303
    %v305 = vcombine.low %v281, %v297
    %v306 = vcombine.high %v281, %v297
    %v308 = vunpack.c.l.s4 1934713408
    %v309 = vunpack.c.0.s8 %v308
    %v310 = vlaneseq
    %v311 = vshrl.u32 %v310, 7
    %v312 = vsub.s32 %v309, %v311
    %v313 = vrot.slane %v305, %v312
    %v315 = vunpack.c.l.s4 1934713408
    %v316 = vunpack.c.0.s8 %v315
    %v317 = vlaneseq
    %v318 = vshrl.u32 %v317, 7
    %v319 = vsub.s32 %v316, %v318
    %v320 = vrot.slane %v306, %v319
    %v321 = vcombine.low %v288, %v304
    %v322 = vcombine.high %v288, %v304
    %v324 = vunpack.c.l.s4 1934713408
    %v325 = vunpack.c.0.s8 %v324
    %v326 = vlaneseq
    %v327 = vshrl.u32 %v326, 7
    %v328 = vsub.s32 %v325, %v327
    %v329 = vrot.slane %v321, %v328
    %v331 = vunpack.c.l.s4 1934713408
    %v332 = vunpack.c.0.s8 %v331
    %v333 = vlaneseq
    %v334 = vshrl.u32 %v333, 7
    %v335 = vsub.s32 %v332, %v334
    %v336 = vrot.slane %v322, %v335
    %v337 = vcombine.high %v313, 0.0
    %v338 = vcombine.high %v320, 0.0
    %v339 = vcombine.high %v329, 0.0
    %v340 = vcombine.high %v336, 0.0
    %v341 = vcombine.low %v245, %v252
    %v343 = vunpack.c.l.s4 1983009808
    %v344 = vunpack.c.0.s8 %v343
    %v345 = vlaneseq
    %v346 = vshrl.u32 %v345, 7
    %v347 = vsub.s32 %v344, %v346
    %v348 = vrot.slane %v341, %v347
    %v349 = vcombine.low %v269, %v270
    %v351 = vunpack.c.l.s4 1983009808
    %v352 = vunpack.c.0.s8 %v351
    %v353 = vlaneseq
    %v354 = vshrl.u32 %v353, 7
    %v355 = vsub.s32 %v352, %v354
    %v356 = vrot.slane %v349, %v355
    %v357 = vcombine.low %v261, %v268
    %v359 = vunpack.c.l.s4 1983009808
    %v360 = vunpack.c.0.s8 %v359
    %v361 = vlaneseq
    %v362 = vshrl.u32 %v361, 7
    %v363 = vsub.s32 %v360, %v362
    %v364 = vrot.slane %v357, %v363
    %v365 = vcombine.low %v271, %v272
    %v367 = vunpack.c.l.s4 1983009808
    %v368 = vunpack.c.0.s8 %v367
    %v369 = vlaneseq
    %v370 = vshrl.u32 %v369, 7
    %v371 = vsub.s32 %v368, %v370
    %v372 = vrot.slane %v365, %v371
    %v373 = vcombine.low %v348, %v356
    %v374 = vcombine.high %v348, %v356
    %v376 = vunpack.c.l.s4 1934713408
    %v377 = vunpack.c.0.s8 %v376
    %v378 = vlaneseq
    %v379 = vshrl.u32 %v378, 7
    %v380 = vsub.s32 %v377, %v379
    %v381 = vrot.slane %v373, %v380
    %v383 = vunpack.c.l.s4 1934713408
    %v384 = vunpack.c.0.s8 %v383
    %v385 = vlaneseq
    %v386 = vshrl.u32 %v385, 7
    %v387 = vsub.s32 %v384, %v386
    %v388 = vrot.slane %v374, %v387
    %v389 = vcombine.low %v364, %v372
    %v390 = vcombine.high %v364, %v372
    %v392 = vunpack.c.l.s4 1934713408
    %v393 = vunpack.c.0.s8 %v392
    %v394 = vlaneseq
    %v395 = vshrl.u32 %v394, 7
    %v396 = vsub.s32 %v393, %v395
    %v397 = vrot.slane %v389, %v396
    %v399 = vunpack.c.l.s4 1934713408
    %v400 = vunpack.c.0.s8 %v399
    %v401 = vlaneseq
    %v402 = vshrl.u32 %v401, 7
    %v403 = vsub.s32 %v400, %v402
    %v404 = vrot.slane %v390, %v403
    %v405 = vcombine.low %v381, %v397
    %v406 = vcombine.high %v381, %v397
    %v407 = vcombine.low %v388, %v404
    %v408 = vcombine.high %v388, %v404
    %v409 = vcombine.low %v313, %v320
    %v411 = vunpack.c.l.s4 1983009808
    %v412 = vunpack.c.0.s8 %v411
    %v413 = vlaneseq
    %v414 = vshrl.u32 %v413, 7
    %v415 = vsub.s32 %v412, %v414
    %v416 = vrot.slane %v409, %v415
    %v417 = vcombine.low %v337, %v338
    %v419 = vunpack.c.l.s4 1983009808
    %v420 = vunpack.c.0.s8 %v419
    %v421 = vlaneseq
    %v422 = vshrl.u32 %v421, 7
    %v423 = vsub.s32 %v420, %v422
    %v424 = vrot.slane %v417, %v423
    %v425 = vcombine.low %v329, %v336
    %v427 = vunpack.c.l.s4 1983009808
    %v428 = vunpack.c.0.s8 %v427
    %v429 = vlaneseq
    %v430 = vshrl.u32 %v429, 7
    %v431 = vsub.s32 %v428, %v430
    %v432 = vrot.slane %v425, %v431
    %v433 = vcombine.low %v339, %v340
    %v435 = vunpack.c.l.s4 1983009808
    %v436 = vunpack.c.0.s8 %v435
    %v437 = vlaneseq
    %v438 = vshrl.u32 %v437, 7
    %v439 = vsub.s32 %v436, %v438
    %v440 = vrot.slane %v433, %v439
    %v441 = vcombine.low %v416, %v424
    %v442 = vcombine.high %v416, %v424
    %v444 = vunpack.c.l.s4 1934713408
    %v445 = vunpack.c.0.s8 %v444
    %v446 = vlaneseq
    %v447 = vshrl.u32 %v446, 7
    %v448 = vsub.s32 %v445, %v447
    %v449 = vrot.slane %v441, %v448
    %v451 = vunpack.c.l.s4 1934713408
    %v452 = vunpack.c.0.s8 %v451
    %v453 = vlaneseq
    %v454 = vshrl.u32 %v453, 7
    %v455 = vsub.s32 %v452, %v454
    %v456 = vrot.slane %v442, %v455
    %v457 = vcombine.low %v432, %v440
    %v458 = vcombine.high %v432, %v440
    %v460 = vunpack.c.l.s4 1934713408
    %v461 = vunpack.c.0.s8 %v460
    %v462 = vlaneseq
    %v463 = vshrl.u32 %v462, 7
    %v464 = vsub.s32 %v461, %v463
    %v465 = vrot.slane %v457, %v464
    %v467 = vunpack.c.l.s4 1934713408
    %v468 = vunpack.c.0.s8 %v467
    %v469 = vlaneseq
    %v470 = vshrl.u32 %v469, 7
    %v471 = vsub.s32 %v468, %v470
    %v472 = vrot.slane %v458, %v471
    %v473 = vcombine.low %v449, %v465
    %v474 = vcombine.high %v449, %v465
    %v475 = vcombine.low %v456, %v472
    %v476 = vcombine.high %v456, %v472
    %477 = vrot.lane.b32.xlu0 %v177, 96
    %v478 = vpop.permute.xlu0 %477
    %479 = vrot.lane.b32.xlu0 %v182, 96
    %v480 = vpop.permute.xlu0 %479
    %481 = vrot.lane.b32.xlu0 %v188, 96
    %v482 = vpop.permute.xlu0 %481
    %483 = vrot.lane.b32.xlu0 %v190, 96
    %v484 = vpop.permute.xlu0 %483
    %485 = vrot.lane.b32.xlu0 %v194, 96
    %v486 = vpop.permute.xlu0 %485
    %487 = vrot.lane.b32.xlu0 %v196, 96
    %v488 = vpop.permute.xlu0 %487
    %489 = vrot.lane.b32.xlu0 %v200, 96
    %v490 = vpop.permute.xlu0 %489
    %491 = vrot.lane.b32.xlu0 %v202, 96
    %v492 = vpop.permute.xlu0 %491
    %v501 = vcombine.low %v478, %v486
    %v502 = vcombine.high %v478, %v486
    %v504 = vunpack.c.l.s4 1983009808
    %v505 = vunpack.c.0.s8 %v504
    %v506 = vlaneseq
    %v507 = vshrl.u32 %v506, 7
    %v508 = vsub.s32 %v505, %v507
    %v509 = vrot.slane %v501, %v508
    %v511 = vunpack.c.l.s4 1983009808
    %v512 = vunpack.c.0.s8 %v511
    %v513 = vlaneseq
    %v514 = vshrl.u32 %v513, 7
    %v515 = vsub.s32 %v512, %v514
    %v516 = vrot.slane %v502, %v515
    %v517 = vcombine.low %v482, %v490
    %v518 = vcombine.high %v482, %v490
    %v520 = vunpack.c.l.s4 1983009808
    %v521 = vunpack.c.0.s8 %v520
    %v522 = vlaneseq
    %v523 = vshrl.u32 %v522, 7
    %v524 = vsub.s32 %v521, %v523
    %v525 = vrot.slane %v517, %v524
    %v527 = vunpack.c.l.s4 1983009808
    %v528 = vunpack.c.0.s8 %v527
    %v529 = vlaneseq
    %v530 = vshrl.u32 %v529, 7
    %v531 = vsub.s32 %v528, %v530
    %v532 = vrot.slane %v518, %v531
    %v533 = vcombine.low %v509, %v525
    %v534 = vcombine.high %v509, %v525
    %v536 = vunpack.c.l.s4 1934713408
    %v537 = vunpack.c.0.s8 %v536
    %v538 = vlaneseq
    %v539 = vshrl.u32 %v538, 7
    %v540 = vsub.s32 %v537, %v539
    %v541 = vrot.slane %v533, %v540
    %v543 = vunpack.c.l.s4 1934713408
    %v544 = vunpack.c.0.s8 %v543
    %v545 = vlaneseq
    %v546 = vshrl.u32 %v545, 7
    %v547 = vsub.s32 %v544, %v546
    %v548 = vrot.slane %v534, %v547
    %v549 = vcombine.low %v516, %v532
    %v550 = vcombine.high %v516, %v532
    %v552 = vunpack.c.l.s4 1934713408
    %v553 = vunpack.c.0.s8 %v552
    %v554 = vlaneseq
    %v555 = vshrl.u32 %v554, 7
    %v556 = vsub.s32 %v553, %v555
    %v557 = vrot.slane %v549, %v556
    %v559 = vunpack.c.l.s4 1934713408
    %v560 = vunpack.c.0.s8 %v559
    %v561 = vlaneseq
    %v562 = vshrl.u32 %v561, 7
    %v563 = vsub.s32 %v560, %v562
    %v564 = vrot.slane %v550, %v563
    %v565 = vcombine.high %v541, 0.0
    %v566 = vcombine.high %v548, 0.0
    %v567 = vcombine.high %v557, 0.0
    %v568 = vcombine.high %v564, 0.0
    %v569 = vcombine.low %v480, %v488
    %v570 = vcombine.high %v480, %v488
    %v572 = vunpack.c.l.s4 1983009808
    %v573 = vunpack.c.0.s8 %v572
    %v574 = vlaneseq
    %v575 = vshrl.u32 %v574, 7
    %v576 = vsub.s32 %v573, %v575
    %v577 = vrot.slane %v569, %v576
    %v579 = vunpack.c.l.s4 1983009808
    %v580 = vunpack.c.0.s8 %v579
    %v581 = vlaneseq
    %v582 = vshrl.u32 %v581, 7
    %v583 = vsub.s32 %v580, %v582
    %v584 = vrot.slane %v570, %v583
    %v585 = vcombine.low %v484, %v492
    %v586 = vcombine.high %v484, %v492
    %v588 = vunpack.c.l.s4 1983009808
    %v589 = vunpack.c.0.s8 %v588
    %v590 = vlaneseq
    %v591 = vshrl.u32 %v590, 7
    %v592 = vsub.s32 %v589, %v591
    %v593 = vrot.slane %v585, %v592
    %v595 = vunpack.c.l.s4 1983009808
    %v596 = vunpack.c.0.s8 %v595
    %v597 = vlaneseq
    %v598 = vshrl.u32 %v597, 7
    %v599 = vsub.s32 %v596, %v598
    %v600 = vrot.slane %v586, %v599
    %v601 = vcombine.low %v577, %v593
    %v602 = vcombine.high %v577, %v593
    %v604 = vunpack.c.l.s4 1934713408
    %v605 = vunpack.c.0.s8 %v604
    %v606 = vlaneseq
    %v607 = vshrl.u32 %v606, 7
    %v608 = vsub.s32 %v605, %v607
    %v609 = vrot.slane %v601, %v608
    %v611 = vunpack.c.l.s4 1934713408
    %v612 = vunpack.c.0.s8 %v611
    %v613 = vlaneseq
    %v614 = vshrl.u32 %v613, 7
    %v615 = vsub.s32 %v612, %v614
    %v616 = vrot.slane %v602, %v615
    %v617 = vcombine.low %v584, %v600
    %v618 = vcombine.high %v584, %v600
    %v620 = vunpack.c.l.s4 1934713408
    %v621 = vunpack.c.0.s8 %v620
    %v622 = vlaneseq
    %v623 = vshrl.u32 %v622, 7
    %v624 = vsub.s32 %v621, %v623
    %v625 = vrot.slane %v617, %v624
    %v627 = vunpack.c.l.s4 1934713408
    %v628 = vunpack.c.0.s8 %v627
    %v629 = vlaneseq
    %v630 = vshrl.u32 %v629, 7
    %v631 = vsub.s32 %v628, %v630
    %v632 = vrot.slane %v618, %v631
    %v633 = vcombine.high %v609, 0.0
    %v634 = vcombine.high %v616, 0.0
    %v635 = vcombine.high %v625, 0.0
    %v636 = vcombine.high %v632, 0.0
    %v637 = vcombine.low %v541, %v548
    %v639 = vunpack.c.l.s4 1983009808
    %v640 = vunpack.c.0.s8 %v639
    %v641 = vlaneseq
    %v642 = vshrl.u32 %v641, 7
    %v643 = vsub.s32 %v640, %v642
    %v644 = vrot.slane %v637, %v643
    %v645 = vcombine.low %v565, %v566
    %v647 = vunpack.c.l.s4 1983009808
    %v648 = vunpack.c.0.s8 %v647
    %v649 = vlaneseq
    %v650 = vshrl.u32 %v649, 7
    %v651 = vsub.s32 %v648, %v650
    %v652 = vrot.slane %v645, %v651
    %v653 = vcombine.low %v557, %v564
    %v655 = vunpack.c.l.s4 1983009808
    %v656 = vunpack.c.0.s8 %v655
    %v657 = vlaneseq
    %v658 = vshrl.u32 %v657, 7
    %v659 = vsub.s32 %v656, %v658
    %v660 = vrot.slane %v653, %v659
    %v661 = vcombine.low %v567, %v568
    %v663 = vunpack.c.l.s4 1983009808
    %v664 = vunpack.c.0.s8 %v663
    %v665 = vlaneseq
    %v666 = vshrl.u32 %v665, 7
    %v667 = vsub.s32 %v664, %v666
    %v668 = vrot.slane %v661, %v667
    %v669 = vcombine.low %v644, %v652
    %v670 = vcombine.high %v644, %v652
    %v672 = vunpack.c.l.s4 1934713408
    %v673 = vunpack.c.0.s8 %v672
    %v674 = vlaneseq
    %v675 = vshrl.u32 %v674, 7
    %v676 = vsub.s32 %v673, %v675
    %v677 = vrot.slane %v669, %v676
    %v679 = vunpack.c.l.s4 1934713408
    %v680 = vunpack.c.0.s8 %v679
    %v681 = vlaneseq
    %v682 = vshrl.u32 %v681, 7
    %v683 = vsub.s32 %v680, %v682
    %v684 = vrot.slane %v670, %v683
    %v685 = vcombine.low %v660, %v668
    %v686 = vcombine.high %v660, %v668
    %v688 = vunpack.c.l.s4 1934713408
    %v689 = vunpack.c.0.s8 %v688
    %v690 = vlaneseq
    %v691 = vshrl.u32 %v690, 7
    %v692 = vsub.s32 %v689, %v691
    %v693 = vrot.slane %v685, %v692
    %v695 = vunpack.c.l.s4 1934713408
    %v696 = vunpack.c.0.s8 %v695
    %v697 = vlaneseq
    %v698 = vshrl.u32 %v697, 7
    %v699 = vsub.s32 %v696, %v698
    %v700 = vrot.slane %v686, %v699
    %v701 = vcombine.low %v677, %v693
    %v702 = vcombine.high %v677, %v693
    %v703 = vcombine.low %v684, %v700
    %v704 = vcombine.high %v684, %v700
    %v705 = vcombine.low %v609, %v616
    %v707 = vunpack.c.l.s4 1983009808
    %v708 = vunpack.c.0.s8 %v707
    %v709 = vlaneseq
    %v710 = vshrl.u32 %v709, 7
    %v711 = vsub.s32 %v708, %v710
    %v712 = vrot.slane %v705, %v711
    %v713 = vcombine.low %v633, %v634
    %v715 = vunpack.c.l.s4 1983009808
    %v716 = vunpack.c.0.s8 %v715
    %v717 = vlaneseq
    %v718 = vshrl.u32 %v717, 7
    %v719 = vsub.s32 %v716, %v718
    %v720 = vrot.slane %v713, %v719
    %v721 = vcombine.low %v625, %v632
    %v723 = vunpack.c.l.s4 1983009808
    %v724 = vunpack.c.0.s8 %v723
    %v725 = vlaneseq
    %v726 = vshrl.u32 %v725, 7
    %v727 = vsub.s32 %v724, %v726
    %v728 = vrot.slane %v721, %v727
    %v729 = vcombine.low %v635, %v636
    %v731 = vunpack.c.l.s4 1983009808
    %v732 = vunpack.c.0.s8 %v731
    %v733 = vlaneseq
    %v734 = vshrl.u32 %v733, 7
    %v735 = vsub.s32 %v732, %v734
    %v736 = vrot.slane %v729, %v735
    %v737 = vcombine.low %v712, %v720
    %v738 = vcombine.high %v712, %v720
    %v740 = vunpack.c.l.s4 1934713408
    %v741 = vunpack.c.0.s8 %v740
    %v742 = vlaneseq
    %v743 = vshrl.u32 %v742, 7
    %v744 = vsub.s32 %v741, %v743
    %v745 = vrot.slane %v737, %v744
    %v747 = vunpack.c.l.s4 1934713408
    %v748 = vunpack.c.0.s8 %v747
    %v749 = vlaneseq
    %v750 = vshrl.u32 %v749, 7
    %v751 = vsub.s32 %v748, %v750
    %v752 = vrot.slane %v738, %v751
    %v753 = vcombine.low %v728, %v736
    %v754 = vcombine.high %v728, %v736
    %v756 = vunpack.c.l.s4 1934713408
    %v757 = vunpack.c.0.s8 %v756
    %v758 = vlaneseq
    %v759 = vshrl.u32 %v758, 7
    %v760 = vsub.s32 %v757, %v759
    %v761 = vrot.slane %v753, %v760
    %v763 = vunpack.c.l.s4 1934713408
    %v764 = vunpack.c.0.s8 %v763
    %v765 = vlaneseq
    %v766 = vshrl.u32 %v765, 7
    %v767 = vsub.s32 %v764, %v766
    %v768 = vrot.slane %v754, %v767
    %v769 = vcombine.low %v745, %v761
    %v770 = vcombine.high %v745, %v761
    %v771 = vcombine.low %v752, %v768
    %v772 = vcombine.high %v752, %v768
    %773 = vrot.lane.b32.xlu0 %v177, 64
    %v774 = vpop.permute.xlu0 %773
    %775 = vrot.lane.b32.xlu0 %v182, 64
    %v776 = vpop.permute.xlu0 %775
    %777 = vrot.lane.b32.xlu0 %v188, 64
    %v778 = vpop.permute.xlu0 %777
    %779 = vrot.lane.b32.xlu0 %v190, 64
    %v780 = vpop.permute.xlu0 %779
    %781 = vrot.lane.b32.xlu0 %v194, 64
    %v782 = vpop.permute.xlu0 %781
    %783 = vrot.lane.b32.xlu0 %v196, 64
    %v784 = vpop.permute.xlu0 %783
    %785 = vrot.lane.b32.xlu0 %v200, 64
    %v786 = vpop.permute.xlu0 %785
    %787 = vrot.lane.b32.xlu0 %v202, 64
    %v788 = vpop.permute.xlu0 %787
    %v797 = vcombine.low %v774, %v782
    %v798 = vcombine.high %v774, %v782
    %v800 = vunpack.c.l.s4 1983009808
    %v801 = vunpack.c.0.s8 %v800
    %v802 = vlaneseq
    %v803 = vshrl.u32 %v802, 7
    %v804 = vsub.s32 %v801, %v803
    %v805 = vrot.slane %v797, %v804
    %v807 = vunpack.c.l.s4 1983009808
    %v808 = vunpack.c.0.s8 %v807
    %v809 = vlaneseq
    %v810 = vshrl.u32 %v809, 7
    %v811 = vsub.s32 %v808, %v810
    %v812 = vrot.slane %v798, %v811
    %v813 = vcombine.low %v778, %v786
    %v814 = vcombine.high %v778, %v786
    %v816 = vunpack.c.l.s4 1983009808
    %v817 = vunpack.c.0.s8 %v816
    %v818 = vlaneseq
    %v819 = vshrl.u32 %v818, 7
    %v820 = vsub.s32 %v817, %v819
    %v821 = vrot.slane %v813, %v820
    %v823 = vunpack.c.l.s4 1983009808
    %v824 = vunpack.c.0.s8 %v823
    %v825 = vlaneseq
    %v826 = vshrl.u32 %v825, 7
    %v827 = vsub.s32 %v824, %v826
    %v828 = vrot.slane %v814, %v827
    %v829 = vcombine.low %v805, %v821
    %v830 = vcombine.high %v805, %v821
    %v832 = vunpack.c.l.s4 1934713408
    %v833 = vunpack.c.0.s8 %v832
    %v834 = vlaneseq
    %v835 = vshrl.u32 %v834, 7
    %v836 = vsub.s32 %v833, %v835
    %v837 = vrot.slane %v829, %v836
    %v839 = vunpack.c.l.s4 1934713408
    %v840 = vunpack.c.0.s8 %v839
    %v841 = vlaneseq
    %v842 = vshrl.u32 %v841, 7
    %v843 = vsub.s32 %v840, %v842
    %v844 = vrot.slane %v830, %v843
    %v845 = vcombine.low %v812, %v828
    %v846 = vcombine.high %v812, %v828
    %v848 = vunpack.c.l.s4 1934713408
    %v849 = vunpack.c.0.s8 %v848
    %v850 = vlaneseq
    %v851 = vshrl.u32 %v850, 7
    %v852 = vsub.s32 %v849, %v851
    %v853 = vrot.slane %v845, %v852
    %v855 = vunpack.c.l.s4 1934713408
    %v856 = vunpack.c.0.s8 %v855
    %v857 = vlaneseq
    %v858 = vshrl.u32 %v857, 7
    %v859 = vsub.s32 %v856, %v858
    %v860 = vrot.slane %v846, %v859
    %v861 = vcombine.high %v837, 0.0
    %v862 = vcombine.high %v844, 0.0
    %v863 = vcombine.high %v853, 0.0
    %v864 = vcombine.high %v860, 0.0
    %v865 = vcombine.low %v776, %v784
    %v866 = vcombine.high %v776, %v784
    %v868 = vunpack.c.l.s4 1983009808
    %v869 = vunpack.c.0.s8 %v868
    %v870 = vlaneseq
    %v871 = vshrl.u32 %v870, 7
    %v872 = vsub.s32 %v869, %v871
    %v873 = vrot.slane %v865, %v872
    %v875 = vunpack.c.l.s4 1983009808
    %v876 = vunpack.c.0.s8 %v875
    %v877 = vlaneseq
    %v878 = vshrl.u32 %v877, 7
    %v879 = vsub.s32 %v876, %v878
    %v880 = vrot.slane %v866, %v879
    %v881 = vcombine.low %v780, %v788
    %v882 = vcombine.high %v780, %v788
    %v884 = vunpack.c.l.s4 1983009808
    %v885 = vunpack.c.0.s8 %v884
    %v886 = vlaneseq
    %v887 = vshrl.u32 %v886, 7
    %v888 = vsub.s32 %v885, %v887
    %v889 = vrot.slane %v881, %v888
    %v891 = vunpack.c.l.s4 1983009808
    %v892 = vunpack.c.0.s8 %v891
    %v893 = vlaneseq
    %v894 = vshrl.u32 %v893, 7
    %v895 = vsub.s32 %v892, %v894
    %v896 = vrot.slane %v882, %v895
    %v897 = vcombine.low %v873, %v889
    %v898 = vcombine.high %v873, %v889
    %v900 = vunpack.c.l.s4 1934713408
    %v901 = vunpack.c.0.s8 %v900
    %v902 = vlaneseq
    %v903 = vshrl.u32 %v902, 7
    %v904 = vsub.s32 %v901, %v903
    %v905 = vrot.slane %v897, %v904
    %v907 = vunpack.c.l.s4 1934713408
    %v908 = vunpack.c.0.s8 %v907
    %v909 = vlaneseq
    %v910 = vshrl.u32 %v909, 7
    %v911 = vsub.s32 %v908, %v910
    %v912 = vrot.slane %v898, %v911
    %v913 = vcombine.low %v880, %v896
    %v914 = vcombine.high %v880, %v896
    %v916 = vunpack.c.l.s4 1934713408
    %v917 = vunpack.c.0.s8 %v916
    %v918 = vlaneseq
    %v919 = vshrl.u32 %v918, 7
    %v920 = vsub.s32 %v917, %v919
    %v921 = vrot.slane %v913, %v920
    %v923 = vunpack.c.l.s4 1934713408
    %v924 = vunpack.c.0.s8 %v923
    %v925 = vlaneseq
    %v926 = vshrl.u32 %v925, 7
    %v927 = vsub.s32 %v924, %v926
    %v928 = vrot.slane %v914, %v927
    %v929 = vcombine.high %v905, 0.0
    %v930 = vcombine.high %v912, 0.0
    %v931 = vcombine.high %v921, 0.0
    %v932 = vcombine.high %v928, 0.0
    %v933 = vcombine.low %v837, %v844
    %v935 = vunpack.c.l.s4 1983009808
    %v936 = vunpack.c.0.s8 %v935
    %v937 = vlaneseq
    %v938 = vshrl.u32 %v937, 7
    %v939 = vsub.s32 %v936, %v938
    %v940 = vrot.slane %v933, %v939
    %v941 = vcombine.low %v861, %v862
    %v943 = vunpack.c.l.s4 1983009808
    %v944 = vunpack.c.0.s8 %v943
    %v945 = vlaneseq
    %v946 = vshrl.u32 %v945, 7
    %v947 = vsub.s32 %v944, %v946
    %v948 = vrot.slane %v941, %v947
    %v949 = vcombine.low %v853, %v860
    %v951 = vunpack.c.l.s4 1983009808
    %v952 = vunpack.c.0.s8 %v951
    %v953 = vlaneseq
    %v954 = vshrl.u32 %v953, 7
    %v955 = vsub.s32 %v952, %v954
    %v956 = vrot.slane %v949, %v955
    %v957 = vcombine.low %v863, %v864
    %v959 = vunpack.c.l.s4 1983009808
    %v960 = vunpack.c.0.s8 %v959
    %v961 = vlaneseq
    %v962 = vshrl.u32 %v961, 7
    %v963 = vsub.s32 %v960, %v962
    %v964 = vrot.slane %v957, %v963
    %v965 = vcombine.low %v940, %v948
    %v966 = vcombine.high %v940, %v948
    %v968 = vunpack.c.l.s4 1934713408
    %v969 = vunpack.c.0.s8 %v968
    %v970 = vlaneseq
    %v971 = vshrl.u32 %v970, 7
    %v972 = vsub.s32 %v969, %v971
    %v973 = vrot.slane %v965, %v972
    %v975 = vunpack.c.l.s4 1934713408
    %v976 = vunpack.c.0.s8 %v975
    %v977 = vlaneseq
    %v978 = vshrl.u32 %v977, 7
    %v979 = vsub.s32 %v976, %v978
    %v980 = vrot.slane %v966, %v979
    %v981 = vcombine.low %v956, %v964
    %v982 = vcombine.high %v956, %v964
    %v984 = vunpack.c.l.s4 1934713408
    %v985 = vunpack.c.0.s8 %v984
    %v986 = vlaneseq
    %v987 = vshrl.u32 %v986, 7
    %v988 = vsub.s32 %v985, %v987
    %v989 = vrot.slane %v981, %v988
    %v991 = vunpack.c.l.s4 1934713408
    %v992 = vunpack.c.0.s8 %v991
    %v993 = vlaneseq
    %v994 = vshrl.u32 %v993, 7
    %v995 = vsub.s32 %v992, %v994
    %v996 = vrot.slane %v982, %v995
    %v997 = vcombine.low %v973, %v989
    %v998 = vcombine.high %v973, %v989
    %v999 = vcombine.low %v980, %v996
    %v1000 = vcombine.high %v980, %v996
    %v1001 = vcombine.low %v905, %v912
    %v1003 = vunpack.c.l.s4 1983009808
    %v1004 = vunpack.c.0.s8 %v1003
    %v1005 = vlaneseq
    %v1006 = vshrl.u32 %v1005, 7
    %v1007 = vsub.s32 %v1004, %v1006
    %v1008 = vrot.slane %v1001, %v1007
    %v1009 = vcombine.low %v929, %v930
    %v1011 = vunpack.c.l.s4 1983009808
    %v1012 = vunpack.c.0.s8 %v1011
    %v1013 = vlaneseq
    %v1014 = vshrl.u32 %v1013, 7
    %v1015 = vsub.s32 %v1012, %v1014
    %v1016 = vrot.slane %v1009, %v1015
    %v1017 = vcombine.low %v921, %v928
    %v1019 = vunpack.c.l.s4 1983009808
    %v1020 = vunpack.c.0.s8 %v1019
    %v1021 = vlaneseq
    %v1022 = vshrl.u32 %v1021, 7
    %v1023 = vsub.s32 %v1020, %v1022
    %v1024 = vrot.slane %v1017, %v1023
    %v1025 = vcombine.low %v931, %v932
    %v1027 = vunpack.c.l.s4 1983009808
    %v1028 = vunpack.c.0.s8 %v1027
    %v1029 = vlaneseq
    %v1030 = vshrl.u32 %v1029, 7
    %v1031 = vsub.s32 %v1028, %v1030
    %v1032 = vrot.slane %v1025, %v1031
    %v1033 = vcombine.low %v1008, %v1016
    %v1034 = vcombine.high %v1008, %v1016
    %v1036 = vunpack.c.l.s4 1934713408
    %v1037 = vunpack.c.0.s8 %v1036
    %v1038 = vlaneseq
    %v1039 = vshrl.u32 %v1038, 7
    %v1040 = vsub.s32 %v1037, %v1039
    %v1041 = vrot.slane %v1033, %v1040
    %v1043 = vunpack.c.l.s4 1934713408
    %v1044 = vunpack.c.0.s8 %v1043
    %v1045 = vlaneseq
    %v1046 = vshrl.u32 %v1045, 7
    %v1047 = vsub.s32 %v1044, %v1046
    %v1048 = vrot.slane %v1034, %v1047
    %v1049 = vcombine.low %v1024, %v1032
    %v1050 = vcombine.high %v1024, %v1032
    %v1052 = vunpack.c.l.s4 1934713408
    %v1053 = vunpack.c.0.s8 %v1052
    %v1054 = vlaneseq
    %v1055 = vshrl.u32 %v1054, 7
    %v1056 = vsub.s32 %v1053, %v1055
    %v1057 = vrot.slane %v1049, %v1056
    %v1059 = vunpack.c.l.s4 1934713408
    %v1060 = vunpack.c.0.s8 %v1059
    %v1061 = vlaneseq
    %v1062 = vshrl.u32 %v1061, 7
    %v1063 = vsub.s32 %v1060, %v1062
    %v1064 = vrot.slane %v1050, %v1063
    %v1065 = vcombine.low %v1041, %v1057
    %v1066 = vcombine.high %v1041, %v1057
    %v1067 = vcombine.low %v1048, %v1064
    %v1068 = vcombine.high %v1048, %v1064
    %vm1069 = vcmask 64512
    %v1071 = vsel %vm1069, %v405, 0
    %v1074 = vsel %vm1069, %v473, 0
    %v1077 = vsel %vm1069, %v701, 0
    %v1080 = vsel %vm1069, %v769, 0
    %1082 = vmatprep.subr.mxu0 0.0
    %1083 = vmatpush1.xpose.msra.mxu0 %v1077
    %1084 = vmatprep.subr.mxu0 0.0
    %1085 = vmatpush1.xpose.msra.mxu0 %v1080
    %1086 = vmatprep.subr.mxu0 0.0
    %1087 = vmatpush1.xpose.msra.mxu0 0.0
    %1088 = vmatprep.subr.mxu0 0.0
    %1089 = vmatpush1.xpose.msra.mxu0 0.0
    %1090 = vmatprep.subr.mxu0 0.0
    %1091 = vmatpush1.xpose.msra.mxu0 0.0
    %1092 = vmatprep.subr.mxu0 0.0
    %1093 = vmatpush1.xpose.msra.mxu0 0.0
    %1094 = vmatprep.subr.mxu0 0.0
    %1095 = vmatpush1.xpose.msra.mxu0 0.0
    %1096 = vmatprep.subr.mxu0 0.0
    %1097 = vmatpush1.xpose.msra.mxu0 0.0
    %1098 = vmatprep.subr.mxu0 0.0
    %1099 = vmatpush1.xpose.msra.mxu0 0.0
    %1100 = vmatprep.subr.mxu0 0.0
    %1101 = vmatpush1.xpose.msra.mxu0 0.0
    %1102 = vmatprep.subr.mxu0 0.0
    %1103 = vmatpush1.xpose.msra.mxu0 0.0
    %1104 = vmatprep.subr.mxu0 0.0
    %1105 = vmatpush1.xpose.msra.mxu0 0.0
    %1106 = vmatprep.subr.mxu0 0.0
    %1107 = vmatpush1.xpose.msra.mxu0 0.0
    %1108 = vmatprep.subr.mxu0 0.0
    %1109 = vmatpush1.xpose.msra.mxu0 0.0
    %1110 = vmatprep.subr.mxu0 0.0
    %1111 = vmatpush1.xpose.msra.mxu0 0.0
    %1112 = vmatprep.subr.mxu0 0.0
    %1113 = vmatpush1.xpose.msra.mxu0 0.0
    %1114 = vmatprep.subr.mxu0 0.0
    %1115 = vmatpush1.xpose.msra.mxu0 0.0
    %1116 = vmatprep.subr.mxu0 0.0
    %1117 = vmatpush1.xpose.msra.mxu0 0.0
    %1118 = vmatprep.subr.mxu0 0.0
    %1119 = vmatpush1.xpose.msra.mxu0 0.0
    %1120 = vmatprep.subr.mxu0 0.0
    %1121 = vmatpush1.xpose.msra.mxu0 0.0
    %1122 = vmatprep.subr.mxu0 0.0
    %1123 = vmatpush1.xpose.msra.mxu0 0.0
    %1124 = vmatprep.subr.mxu0 0.0
    %1125 = vmatpush1.xpose.msra.mxu0 0.0
    %1126 = vmatprep.subr.mxu0 0.0
    %1127 = vmatpush1.xpose.msra.mxu0 0.0
    %1128 = vmatprep.subr.mxu0 0.0
    %1129 = vmatpush1.xpose.msra.mxu0 0.0
    %1130 = vmatprep.subr.mxu0 0.0
    %1131 = vmatpush1.xpose.msra.mxu0 0.0
    %1132 = vmatprep.subr.mxu0 0.0
    %1133 = vmatpush1.xpose.msra.mxu0 0.0
    %1134 = vmatprep.subr.mxu0 0.0
    %1135 = vmatpush1.xpose.msra.mxu0 0.0
    %1136 = vmatprep.subr.mxu0 0.0
    %1137 = vmatpush1.xpose.msra.mxu0 0.0
    %1138 = vmatprep.subr.mxu0 0.0
    %1139 = vmatpush1.xpose.msra.mxu0 0.0
    %1140 = vmatprep.subr.mxu0 0.0
    %1141 = vmatpush1.xpose.msra.mxu0 0.0
    %1142 = vmatprep.subr.mxu0 0.0
    %1143 = vmatpush1.xpose.msra.mxu0 0.0
    %1144 = vmatprep.subr.mxu0 0.0
    %1145 = vmatpush1.xpose.msra.mxu0 0.0
    %1146 = vmatprep.mubr.f32.mxu0 0.0
    %1147 = vmatmul.mubr.f32.gmra.mrb[0].mxu0 %v1071
    %v1148 = vpop.f32.mrb[0].mxu0
    %v1149 = vadd.f32 0.0, %v1148
    %v1150 = vpop.f32.mrb[0].mxu0
    %1151 = vmatprep.mubr.f32.mxu0 0.0
    %1152 = vmatmul.mubr.f32.gmra.mrb[0].mxu0 %v1074
    %v1153 = vpop.f32.mrb[0].mxu0
    %v1154 = vadd.f32 0.0, %v1153
    %v1155 = vpop.f32.mrb[0].mxu0
    %1156 = vdwg.mxu0
    %v1158 = vsel %vm1069, %v406, 0
    %v1161 = vsel %vm1069, %v474, 0
    %v1164 = vsel %vm1069, %v702, 0
    %v1167 = vsel %vm1069, %v770, 0
    %1169 = vmatprep.subr.mxu0 0.0
    %1170 = vmatpush1.xpose.msra.mxu0 %v1164
    %1171 = vmatprep.subr.mxu0 0.0
    %1172 = vmatpush1.xpose.msra.mxu0 %v1167
    %1173 = vmatprep.subr.mxu0 0.0
    %1174 = vmatpush1.xpose.msra.mxu0 0.0
    %1175 = vmatprep.subr.mxu0 0.0
    %1176 = vmatpush1.xpose.msra.mxu0 0.0
    %1177 = vmatprep.subr.mxu0 0.0
    %1178 = vmatpush1.xpose.msra.mxu0 0.0
    %1179 = vmatprep.subr.mxu0 0.0
    %1180 = vmatpush1.xpose.msra.mxu0 0.0
    %1181 = vmatprep.subr.mxu0 0.0
    %1182 = vmatpush1.xpose.msra.mxu0 0.0
    %1183 = vmatprep.subr.mxu0 0.0
    %1184 = vmatpush1.xpose.msra.mxu0 0.0
    %1185 = vmatprep.subr.mxu0 0.0
    %1186 = vmatpush1.xpose.msra.mxu0 0.0
    %1187 = vmatprep.subr.mxu0 0.0
    %1188 = vmatpush1.xpose.msra.mxu0 0.0
    %1189 = vmatprep.subr.mxu0 0.0
    %1190 = vmatpush1.xpose.msra.mxu0 0.0
    %1191 = vmatprep.subr.mxu0 0.0
    %1192 = vmatpush1.xpose.msra.mxu0 0.0
    %1193 = vmatprep.subr.mxu0 0.0
    %1194 = vmatpush1.xpose.msra.mxu0 0.0
    %1195 = vmatprep.subr.mxu0 0.0
    %1196 = vmatpush1.xpose.msra.mxu0 0.0
    %1197 = vmatprep.subr.mxu0 0.0
    %1198 = vmatpush1.xpose.msra.mxu0 0.0
    %1199 = vmatprep.subr.mxu0 0.0
    %1200 = vmatpush1.xpose.msra.mxu0 0.0
    %1201 = vmatprep.subr.mxu0 0.0
    %1202 = vmatpush1.xpose.msra.mxu0 0.0
    %1203 = vmatprep.subr.mxu0 0.0
    %1204 = vmatpush1.xpose.msra.mxu0 0.0
    %1205 = vmatprep.subr.mxu0 0.0
    %1206 = vmatpush1.xpose.msra.mxu0 0.0
    %1207 = vmatprep.subr.mxu0 0.0
    %1208 = vmatpush1.xpose.msra.mxu0 0.0
    %1209 = vmatprep.subr.mxu0 0.0
    %1210 = vmatpush1.xpose.msra.mxu0 0.0
    %1211 = vmatprep.subr.mxu0 0.0
    %1212 = vmatpush1.xpose.msra.mxu0 0.0
    %1213 = vmatprep.subr.mxu0 0.0
    %1214 = vmatpush1.xpose.msra.mxu0 0.0
    %1215 = vmatprep.subr.mxu0 0.0
    %1216 = vmatpush1.xpose.msra.mxu0 0.0
    %1217 = vmatprep.subr.mxu0 0.0
    %1218 = vmatpush1.xpose.msra.mxu0 0.0
    %1219 = vmatprep.subr.mxu0 0.0
    %1220 = vmatpush1.xpose.msra.mxu0 0.0
    %1221 = vmatprep.subr.mxu0 0.0
    %1222 = vmatpush1.xpose.msra.mxu0 0.0
    %1223 = vmatprep.subr.mxu0 0.0
    %1224 = vmatpush1.xpose.msra.mxu0 0.0
    %1225 = vmatprep.subr.mxu0 0.0
    %1226 = vmatpush1.xpose.msra.mxu0 0.0
    %1227 = vmatprep.subr.mxu0 0.0
    %1228 = vmatpush1.xpose.msra.mxu0 0.0
    %1229 = vmatprep.subr.mxu0 0.0
    %1230 = vmatpush1.xpose.msra.mxu0 0.0
    %1231 = vmatprep.subr.mxu0 0.0
    %1232 = vmatpush1.xpose.msra.mxu0 0.0
    %1233 = vmatprep.mubr.f32.mxu0 0.0
    %1234 = vmatmul.mubr.f32.gmra.mrb[0].mxu0 %v1158
    %v1235 = vpop.f32.mrb[0].mxu0
    %v1236 = vadd.f32 0.0, %v1235
    %v1237 = vpop.f32.mrb[0].mxu0
    %1238 = vmatprep.mubr.f32.mxu0 0.0
    %1239 = vmatmul.mubr.f32.gmra.mrb[0].mxu0 %v1161
    %v1240 = vpop.f32.mrb[0].mxu0
    %v1241 = vadd.f32 0.0, %v1240
    %v1242 = vpop.f32.mrb[0].mxu0
    %1243 = vdwg.mxu0
    %v1245 = vsel %vm1069, %v407, 0
    %v1248 = vsel %vm1069, %v475, 0
    %v1251 = vsel %vm1069, %v703, 0
    %v1254 = vsel %vm1069, %v771, 0
    %1256 = vmatprep.subr.mxu0 0.0
    %1257 = vmatpush1.xpose.msra.mxu0 %v1251
    %1258 = vmatprep.subr.mxu0 0.0
    %1259 = vmatpush1.xpose.msra.mxu0 %v1254
    %1260 = vmatprep.subr.mxu0 0.0
    %1261 = vmatpush1.xpose.msra.mxu0 0.0
    %1262 = vmatprep.subr.mxu0 0.0
    %1263 = vmatpush1.xpose.msra.mxu0 0.0
    %1264 = vmatprep.subr.mxu0 0.0
    %1265 = vmatpush1.xpose.msra.mxu0 0.0
    %1266 = vmatprep.subr.mxu0 0.0
    %1267 = vmatpush1.xpose.msra.mxu0 0.0
    %1268 = vmatprep.subr.mxu0 0.0
    %1269 = vmatpush1.xpose.msra.mxu0 0.0
    %1270 = vmatprep.subr.mxu0 0.0
    %1271 = vmatpush1.xpose.msra.mxu0 0.0
    %1272 = vmatprep.subr.mxu0 0.0
    %1273 = vmatpush1.xpose.msra.mxu0 0.0
    %1274 = vmatprep.subr.mxu0 0.0
    %1275 = vmatpush1.xpose.msra.mxu0 0.0
    %1276 = vmatprep.subr.mxu0 0.0
    %1277 = vmatpush1.xpose.msra.mxu0 0.0
    %1278 = vmatprep.subr.mxu0 0.0
    %1279 = vmatpush1.xpose.msra.mxu0 0.0
    %1280 = vmatprep.subr.mxu0 0.0
    %1281 = vmatpush1.xpose.msra.mxu0 0.0
    %1282 = vmatprep.subr.mxu0 0.0
    %1283 = vmatpush1.xpose.msra.mxu0 0.0
    %1284 = vmatprep.subr.mxu0 0.0
    %1285 = vmatpush1.xpose.msra.mxu0 0.0
    %1286 = vmatprep.subr.mxu0 0.0
    %1287 = vmatpush1.xpose.msra.mxu0 0.0
    %1288 = vmatprep.subr.mxu0 0.0
    %1289 = vmatpush1.xpose.msra.mxu0 0.0
    %1290 = vmatprep.subr.mxu0 0.0
    %1291 = vmatpush1.xpose.msra.mxu0 0.0
    %1292 = vmatprep.subr.mxu0 0.0
    %1293 = vmatpush1.xpose.msra.mxu0 0.0
    %1294 = vmatprep.subr.mxu0 0.0
    %1295 = vmatpush1.xpose.msra.mxu0 0.0
    %1296 = vmatprep.subr.mxu0 0.0
    %1297 = vmatpush1.xpose.msra.mxu0 0.0
    %1298 = vmatprep.subr.mxu0 0.0
    %1299 = vmatpush1.xpose.msra.mxu0 0.0
    %1300 = vmatprep.subr.mxu0 0.0
    %1301 = vmatpush1.xpose.msra.mxu0 0.0
    %1302 = vmatprep.subr.mxu0 0.0
    %1303 = vmatpush1.xpose.msra.mxu0 0.0
    %1304 = vmatprep.subr.mxu0 0.0
    %1305 = vmatpush1.xpose.msra.mxu0 0.0
    %1306 = vmatprep.subr.mxu0 0.0
    %1307 = vmatpush1.xpose.msra.mxu0 0.0
    %1308 = vmatprep.subr.mxu0 0.0
    %1309 = vmatpush1.xpose.msra.mxu0 0.0
    %1310 = vmatprep.subr.mxu0 0.0
    %1311 = vmatpush1.xpose.msra.mxu0 0.0
    %1312 = vmatprep.subr.mxu0 0.0
    %1313 = vmatpush1.xpose.msra.mxu0 0.0
    %1314 = vmatprep.subr.mxu0 0.0
    %1315 = vmatpush1.xpose.msra.mxu0 0.0
    %1316 = vmatprep.subr.mxu0 0.0
    %1317 = vmatpush1.xpose.msra.mxu0 0.0
    %1318 = vmatprep.subr.mxu0 0.0
    %1319 = vmatpush1.xpose.msra.mxu0 0.0
    %1320 = vmatprep.mubr.f32.mxu0 0.0
    %1321 = vmatmul.mubr.f32.gmra.mrb[0].mxu0 %v1245
    %v1322 = vpop.f32.mrb[0].mxu0
    %v1323 = vadd.f32 0.0, %v1322
    %v1324 = vpop.f32.mrb[0].mxu0
    %1325 = vmatprep.mubr.f32.mxu0 0.0
    %1326 = vmatmul.mubr.f32.gmra.mrb[0].mxu0 %v1248
    %v1327 = vpop.f32.mrb[0].mxu0
    %v1328 = vadd.f32 0.0, %v1327
    %v1329 = vpop.f32.mrb[0].mxu0
    %1330 = vdwg.mxu0
    %v1332 = vsel %vm1069, %v408, 0
    %v1335 = vsel %vm1069, %v476, 0
    %v1338 = vsel %vm1069, %v704, 0
    %v1341 = vsel %vm1069, %v772, 0
    %1343 = vmatprep.subr.mxu0 0.0
    %1344 = vmatpush1.xpose.msra.mxu0 %v1338
    %1345 = vmatprep.subr.mxu0 0.0
    %1346 = vmatpush1.xpose.msra.mxu0 %v1341
    %1347 = vmatprep.subr.mxu0 0.0
    %1348 = vmatpush1.xpose.msra.mxu0 0.0
    %1349 = vmatprep.subr.mxu0 0.0
    %1350 = vmatpush1.xpose.msra.mxu0 0.0
    %1351 = vmatprep.subr.mxu0 0.0
    %1352 = vmatpush1.xpose.msra.mxu0 0.0
    %1353 = vmatprep.subr.mxu0 0.0
    %1354 = vmatpush1.xpose.msra.mxu0 0.0
    %1355 = vmatprep.subr.mxu0 0.0
    %1356 = vmatpush1.xpose.msra.mxu0 0.0
    %1357 = vmatprep.subr.mxu0 0.0
    %1358 = vmatpush1.xpose.msra.mxu0 0.0
    %1359 = vmatprep.subr.mxu0 0.0
    %1360 = vmatpush1.xpose.msra.mxu0 0.0
    %1361 = vmatprep.subr.mxu0 0.0
    %1362 = vmatpush1.xpose.msra.mxu0 0.0
    %1363 = vmatprep.subr.mxu0 0.0
    %1364 = vmatpush1.xpose.msra.mxu0 0.0
    %1365 = vmatprep.subr.mxu0 0.0
    %1366 = vmatpush1.xpose.msra.mxu0 0.0
    %1367 = vmatprep.subr.mxu0 0.0
    %1368 = vmatpush1.xpose.msra.mxu0 0.0
    %1369 = vmatprep.subr.mxu0 0.0
    %1370 = vmatpush1.xpose.msra.mxu0 0.0
    %1371 = vmatprep.subr.mxu0 0.0
    %1372 = vmatpush1.xpose.msra.mxu0 0.0
    %1373 = vmatprep.subr.mxu0 0.0
    %1374 = vmatpush1.xpose.msra.mxu0 0.0
    %1375 = vmatprep.subr.mxu0 0.0
    %1376 = vmatpush1.xpose.msra.mxu0 0.0
    %1377 = vmatprep.subr.mxu0 0.0
    %1378 = vmatpush1.xpose.msra.mxu0 0.0
    %1379 = vmatprep.subr.mxu0 0.0
    %1380 = vmatpush1.xpose.msra.mxu0 0.0
    %1381 = vmatprep.subr.mxu0 0.0
    %1382 = vmatpush1.xpose.msra.mxu0 0.0
    %1383 = vmatprep.subr.mxu0 0.0
    %1384 = vmatpush1.xpose.msra.mxu0 0.0
    %1385 = vmatprep.subr.mxu0 0.0
    %1386 = vmatpush1.xpose.msra.mxu0 0.0
    %1387 = vmatprep.subr.mxu0 0.0
    %1388 = vmatpush1.xpose.msra.mxu0 0.0
    %1389 = vmatprep.subr.mxu0 0.0
    %1390 = vmatpush1.xpose.msra.mxu0 0.0
    %1391 = vmatprep.subr.mxu0 0.0
    %1392 = vmatpush1.xpose.msra.mxu0 0.0
    %1393 = vmatprep.subr.mxu0 0.0
    %1394 = vmatpush1.xpose.msra.mxu0 0.0
    %1395 = vmatprep.subr.mxu0 0.0
    %1396 = vmatpush1.xpose.msra.mxu0 0.0
    %1397 = vmatprep.subr.mxu0 0.0
    %1398 = vmatpush1.xpose.msra.mxu0 0.0
    %1399 = vmatprep.subr.mxu0 0.0
    %1400 = vmatpush1.xpose.msra.mxu0 0.0
    %1401 = vmatprep.subr.mxu0 0.0
    %1402 = vmatpush1.xpose.msra.mxu0 0.0
    %1403 = vmatprep.subr.mxu0 0.0
    %1404 = vmatpush1.xpose.msra.mxu0 0.0
    %1405 = vmatprep.subr.mxu0 0.0
    %1406 = vmatpush1.xpose.msra.mxu0 0.0
    %1407 = vmatprep.mubr.f32.mxu0 0.0
    %1408 = vmatmul.mubr.f32.gmra.mrb[0].mxu0 %v1332
    %v1409 = vpop.f32.mrb[0].mxu0
    %v1410 = vadd.f32 0.0, %v1409
    %v1411 = vpop.f32.mrb[0].mxu0
    %1412 = vmatprep.mubr.f32.mxu0 0.0
    %1413 = vmatmul.mubr.f32.gmra.mrb[0].mxu0 %v1335
    %v1414 = vpop.f32.mrb[0].mxu0
    %v1415 = vadd.f32 0.0, %v1414
    %v1416 = vpop.f32.mrb[0].mxu0
    %1417 = vdwg.mxu0
    %v1418 = vlaneseq
    %v1419 = vshrl.u32 %v1418, 7
    %v1420 = vadd.s32 %v1419, 8
    %v1421 = vlaneseq
    %v1422 = vand.u32 %v1421, 127
    %vm1423 = vcmp.lt.s32.totalorder %v1419, 0
    %v1424 = vsub.s32 0, %v1419
    %v1425 = vsel %vm1423, %v1424, %v1419
    %v1426 = vshrl.u32 %v1425, 1
    %v1427 = vand.u32 %v1425, 1
    %v1428 = vsub.s32 0, %v1427
    %v1429 = vsel %vm1423, %v1428, %v1427
    %vm1430 = vcmp.lt.s32.totalorder %v1420, 0
    %v1431 = vsub.s32 0, %v1420
    %v1432 = vsel %vm1430, %v1431, %v1420
    %v1433 = vshrl.u32 %v1432, 1
    %v1434 = vand.u32 %v1432, 1
    %v1435 = vsub.s32 0, %v1434
    %v1436 = vsel %vm1430, %v1435, %v1434
    %vm1437 = vcmp.ne.s32.totalorder %v1429, 0
    %vm1438 = vcmp.ne.s32.totalorder %v1436, 0
    %vm1439 = vcmp.lt.s32.totalorder %v1429, 0
    %vm1440 = vcmp.lt.s32.totalorder %v1436, 0
    %vm1441 = vmand %vm1439, %vm1437
    %vm1442 = vmand %vm1440, %vm1438
    %v1443 = vadd.s32 %v1429, 2
    %v1444 = vadd.s32 %v1436, 2
    %v1445 = vsel %vm1441, %v1443, %v1429
    %v1446 = vsel %vm1442, %v1444, %v1436
    %vm1447 = vcmp.lt.s32.totalorder %v1422, 0
    %v1448 = vsub.s32 0, %v1422
    %v1449 = vsel %vm1447, %v1448, %v1422
    %v1450 = vshrl.u32 %v1449, 1
    %v1451 = vand.u32 %v1449, 1
    %v1452 = vsub.s32 0, %v1451
    %v1453 = vsel %vm1447, %v1452, %v1451
    %vm1454 = vcmp.ne.s32.totalorder %v1453, 0
    %vm1455 = vcmp.lt.s32.totalorder %v1453, 0
    %vm1456 = vmand %vm1455, %vm1454
    %v1457 = vadd.s32 %v1453, 2
    %v1458 = vsel %vm1456, %v1457, %v1453
    %vm1459 = vcmp.eq.s32.totalorder %v1445, %v1458
    %vm1460 = vcmp.eq.s32.totalorder %v1446, %v1458
    %v1461 = vsel %vm1459, 1, 0
    %v1462 = vsel %vm1460, 1, 0
    %vm1463 = vcmp.eq.s32.totalorder %v1461, 1
    %vm1464 = vcmp.eq.s32.totalorder %v1462, 1
    %v1465 = vsel %vm1463, %v1149, -1e+30
    %v1466 = vsel %vm1464, %v1154, -1e+30
    %v1467 = vsel %vm1463, %v1236, -1e+30
    %v1468 = vsel %vm1464, %v1241, -1e+30
    %v1469 = vsel %vm1463, %v1323, -1e+30
    %v1470 = vsel %vm1464, %v1328, -1e+30
    %v1471 = vsel %vm1463, %v1410, -1e+30
    %v1472 = vsel %vm1464, %v1415, -1e+30
    %vm1473 = vcmask 130048
    %v1474 = vsel %vm1473, %v1465, -inf
    %1475 = vmax.xlane.f32.xlu0 %v1474
    %v1476 = vpop.xlane.xlu0 %1475
    %v1477 = vsel %vm1473, %v1466, -inf
    %1478 = vmax.xlane.f32.xlu0 %v1477
    %v1479 = vpop.xlane.xlu0 %1478
    %v1480 = vsel %vm1473, %v1467, -inf
    %1481 = vmax.xlane.f32.xlu0 %v1480
    %v1482 = vpop.xlane.xlu0 %1481
    %v1483 = vsel %vm1473, %v1468, -inf
    %1484 = vmax.xlane.f32.xlu0 %v1483
    %v1485 = vpop.xlane.xlu0 %1484
    %v1486 = vsel %vm1473, %v1469, -inf
    %1487 = vmax.xlane.f32.xlu0 %v1486
    %v1488 = vpop.xlane.xlu0 %1487
    %v1489 = vsel %vm1473, %v1470, -inf
    %1490 = vmax.xlane.f32.xlu0 %v1489
    %v1491 = vpop.xlane.xlu0 %1490
    %v1492 = vsel %vm1473, %v1471, -inf
    %1493 = vmax.xlane.f32.xlu0 %v1492
    %v1494 = vpop.xlane.xlu0 %1493
    %v1495 = vsel %vm1473, %v1472, -inf
    %1496 = vmax.xlane.f32.xlu0 %v1495
    %v1497 = vpop.xlane.xlu0 %1496
    %v1498 = vsub.f32 %v1465, %v1476
    %v1499 = vsub.f32 %v1466, %v1479
    %v1500 = vsub.f32 %v1467, %v1482
    %v1501 = vsub.f32 %v1468, %v1485
    %v1502 = vsub.f32 %v1469, %v1488
    %v1503 = vsub.f32 %v1470, %v1491
    %v1504 = vsub.f32 %v1471, %v1494
    %v1505 = vsub.f32 %v1472, %v1497
    %v1506 = vmul.f32 %v1498, 1.442695
    %v1507 = vpow.pop %v1506
    %v1508 = vmul.f32 %v1499, 1.442695
    %v1509 = vpow.pop %v1508
    %v1510 = vmul.f32 %v1500, 1.442695
    %v1511 = vpow.pop %v1510
    %v1512 = vmul.f32 %v1501, 1.442695
    %v1513 = vpow.pop %v1512
    %v1514 = vmul.f32 %v1502, 1.442695
    %v1515 = vpow.pop %v1514
    %v1516 = vmul.f32 %v1503, 1.442695
    %v1517 = vpow.pop %v1516
    %v1518 = vmul.f32 %v1504, 1.442695
    %v1519 = vpow.pop %v1518
    %v1520 = vmul.f32 %v1505, 1.442695
    %v1521 = vpow.pop %v1520
    %v1522 = vsel %vm1473, %v1507, 0.0
    %1523 = vadd.xlane.f32.xlu0 %v1522
    %v1524 = vpop.xlane.xlu0 %1523
    %v1525 = vsel %vm1473, %v1509, 0.0
    %1526 = vadd.xlane.f32.xlu0 %v1525
    %v1527 = vpop.xlane.xlu0 %1526
    %v1528 = vsel %vm1473, %v1511, 0.0
    %1529 = vadd.xlane.f32.xlu0 %v1528
    %v1530 = vpop.xlane.xlu0 %1529
    %v1531 = vsel %vm1473, %v1513, 0.0
    %1532 = vadd.xlane.f32.xlu0 %v1531
    %v1533 = vpop.xlane.xlu0 %1532
    %v1534 = vsel %vm1473, %v1515, 0.0
    %1535 = vadd.xlane.f32.xlu0 %v1534
    %v1536 = vpop.xlane.xlu0 %1535
    %v1537 = vsel %vm1473, %v1517, 0.0
    %1538 = vadd.xlane.f32.xlu0 %v1537
    %v1539 = vpop.xlane.xlu0 %1538
    %v1540 = vsel %vm1473, %v1519, 0.0
    %1541 = vadd.xlane.f32.xlu0 %v1540
    %v1542 = vpop.xlane.xlu0 %1541
    %v1543 = vsel %vm1473, %v1521, 0.0
    %1544 = vadd.xlane.f32.xlu0 %v1543
    %v1545 = vpop.xlane.xlu0 %1544
    %v1546 = vrcp.pop %v1524
    %v1547 = vmul.f32 %v1507, %v1546
    %v1548 = vrcp.pop %v1527
    %v1549 = vmul.f32 %v1509, %v1548
    %v1550 = vrcp.pop %v1530
    %v1551 = vmul.f32 %v1511, %v1550
    %v1552 = vrcp.pop %v1533
    %v1553 = vmul.f32 %v1513, %v1552
    %v1554 = vrcp.pop %v1536
    %v1555 = vmul.f32 %v1515, %v1554
    %v1556 = vrcp.pop %v1539
    %v1557 = vmul.f32 %v1517, %v1556
    %v1558 = vrcp.pop %v1542
    %v1559 = vmul.f32 %v1519, %v1558
    %v1560 = vrcp.pop %v1545
    %v1561 = vmul.f32 %v1521, %v1560
    %v1563 = vsel %vm1473, %v1547, 0
    %v1566 = vsel %vm1473, %v1549, 0
    %1568 = vmatprep.subr.mxu0 0.0
    %1569 = vmatpush1.msra.mxu0 %v997
    %1570 = vmatprep.subr.mxu0 0.0
    %1571 = vmatpush1.msra.mxu0 %v1065
    %1572 = vmatprep.subr.mxu0 0.0
    %1573 = vmatpush1.msra.mxu0 0.0
    %1574 = vmatprep.subr.mxu0 0.0
    %1575 = vmatpush1.msra.mxu0 0.0
    %1576 = vmatprep.subr.mxu0 0.0
    %1577 = vmatpush1.msra.mxu0 0.0
    %1578 = vmatprep.subr.mxu0 0.0
    %1579 = vmatpush1.msra.mxu0 0.0
    %1580 = vmatprep.subr.mxu0 0.0
    %1581 = vmatpush1.msra.mxu0 0.0
    %1582 = vmatprep.subr.mxu0 0.0
    %1583 = vmatpush1.msra.mxu0 0.0
    %1584 = vmatprep.subr.mxu0 0.0
    %1585 = vmatpush1.msra.mxu0 0.0
    %1586 = vmatprep.subr.mxu0 0.0
    %1587 = vmatpush1.msra.mxu0 0.0
    %1588 = vmatprep.subr.mxu0 0.0
    %1589 = vmatpush1.msra.mxu0 0.0
    %1590 = vmatprep.subr.mxu0 0.0
    %1591 = vmatpush1.msra.mxu0 0.0
    %1592 = vmatprep.subr.mxu0 0.0
    %1593 = vmatpush1.msra.mxu0 0.0
    %1594 = vmatprep.subr.mxu0 0.0
    %1595 = vmatpush1.msra.mxu0 0.0
    %1596 = vmatprep.subr.mxu0 0.0
    %1597 = vmatpush1.msra.mxu0 0.0
    %1598 = vmatprep.subr.mxu0 0.0
    %1599 = vmatpush1.msra.mxu0 0.0
    %1600 = vmatprep.subr.mxu0 0.0
    %1601 = vmatpush1.msra.mxu0 0.0
    %1602 = vmatprep.subr.mxu0 0.0
    %1603 = vmatpush1.msra.mxu0 0.0
    %1604 = vmatprep.subr.mxu0 0.0
    %1605 = vmatpush1.msra.mxu0 0.0
    %1606 = vmatprep.subr.mxu0 0.0
    %1607 = vmatpush1.msra.mxu0 0.0
    %1608 = vmatprep.subr.mxu0 0.0
    %1609 = vmatpush1.msra.mxu0 0.0
    %1610 = vmatprep.subr.mxu0 0.0
    %1611 = vmatpush1.msra.mxu0 0.0
    %1612 = vmatprep.subr.mxu0 0.0
    %1613 = vmatpush1.msra.mxu0 0.0
    %1614 = vmatprep.subr.mxu0 0.0
    %1615 = vmatpush1.msra.mxu0 0.0
    %1616 = vmatprep.subr.mxu0 0.0
    %1617 = vmatpush1.msra.mxu0 0.0
    %1618 = vmatprep.subr.mxu0 0.0
    %1619 = vmatpush1.msra.mxu0 0.0
    %1620 = vmatprep.subr.mxu0 0.0
    %1621 = vmatpush1.msra.mxu0 0.0
    %1622 = vmatprep.subr.mxu0 0.0
    %1623 = vmatpush1.msra.mxu0 0.0
    %1624 = vmatprep.subr.mxu0 0.0
    %1625 = vmatpush1.msra.mxu0 0.0
    %1626 = vmatprep.subr.mxu0 0.0
    %1627 = vmatpush1.msra.mxu0 0.0
    %1628 = vmatprep.subr.mxu0 0.0
    %1629 = vmatpush1.msra.mxu0 0.0
    %1630 = vmatprep.subr.mxu0 0.0
    %1631 = vmatpush1.msra.mxu0 0.0
    %1632 = vmatprep.mubr.f32.mxu0 0.0
    %1633 = vmatmul.mubr.f32.gmra.mrb[0].mxu0 %v1563
    %v1634 = vpop.f32.mrb[0].mxu0
    %v1635 = vadd.f32 0.0, %v1634
    %v1636 = vpop.f32.mrb[0].mxu0
    %1637 = vmatprep.mubr.f32.mxu0 0.0
    %1638 = vmatmul.mubr.f32.gmra.mrb[0].mxu0 %v1566
    %v1639 = vpop.f32.mrb[0].mxu0
    %v1640 = vadd.f32 0.0, %v1639
    %v1641 = vpop.f32.mrb[0].mxu0
    %1642 = vdwg.mxu0
    %v1644 = vsel %vm1473, %v1551, 0
    %v1647 = vsel %vm1473, %v1553, 0
    %1649 = vmatprep.subr.mxu0 0.0
    %1650 = vmatpush1.msra.mxu0 %v998
    %1651 = vmatprep.subr.mxu0 0.0
    %1652 = vmatpush1.msra.mxu0 %v1066
    %1653 = vmatprep.subr.mxu0 0.0
    %1654 = vmatpush1.msra.mxu0 0.0
    %1655 = vmatprep.subr.mxu0 0.0
    %1656 = vmatpush1.msra.mxu0 0.0
    %1657 = vmatprep.subr.mxu0 0.0
    %1658 = vmatpush1.msra.mxu0 0.0
    %1659 = vmatprep.subr.mxu0 0.0
    %1660 = vmatpush1.msra.mxu0 0.0
    %1661 = vmatprep.subr.mxu0 0.0
    %1662 = vmatpush1.msra.mxu0 0.0
    %1663 = vmatprep.subr.mxu0 0.0
    %1664 = vmatpush1.msra.mxu0 0.0
    %1665 = vmatprep.subr.mxu0 0.0
    %1666 = vmatpush1.msra.mxu0 0.0
    %1667 = vmatprep.subr.mxu0 0.0
    %1668 = vmatpush1.msra.mxu0 0.0
    %1669 = vmatprep.subr.mxu0 0.0
    %1670 = vmatpush1.msra.mxu0 0.0
    %1671 = vmatprep.subr.mxu0 0.0
    %1672 = vmatpush1.msra.mxu0 0.0
    %1673 = vmatprep.subr.mxu0 0.0
    %1674 = vmatpush1.msra.mxu0 0.0
    %1675 = vmatprep.subr.mxu0 0.0
    %1676 = vmatpush1.msra.mxu0 0.0
    %1677 = vmatprep.subr.mxu0 0.0
    %1678 = vmatpush1.msra.mxu0 0.0
    %1679 = vmatprep.subr.mxu0 0.0
    %1680 = vmatpush1.msra.mxu0 0.0
    %1681 = vmatprep.subr.mxu0 0.0
    %1682 = vmatpush1.msra.mxu0 0.0
    %1683 = vmatprep.subr.mxu0 0.0
    %1684 = vmatpush1.msra.mxu0 0.0
    %1685 = vmatprep.subr.mxu0 0.0
    %1686 = vmatpush1.msra.mxu0 0.0
    %1687 = vmatprep.subr.mxu0 0.0
    %1688 = vmatpush1.msra.mxu0 0.0
    %1689 = vmatprep.subr.mxu0 0.0
    %1690 = vmatpush1.msra.mxu0 0.0
    %1691 = vmatprep.subr.mxu0 0.0
    %1692 = vmatpush1.msra.mxu0 0.0
    %1693 = vmatprep.subr.mxu0 0.0
    %1694 = vmatpush1.msra.mxu0 0.0
    %1695 = vmatprep.subr.mxu0 0.0
    %1696 = vmatpush1.msra.mxu0 0.0
    %1697 = vmatprep.subr.mxu0 0.0
    %1698 = vmatpush1.msra.mxu0 0.0
    %1699 = vmatprep.subr.mxu0 0.0
    %1700 = vmatpush1.msra.mxu0 0.0
    %1701 = vmatprep.subr.mxu0 0.0
    %1702 = vmatpush1.msra.mxu0 0.0
    %1703 = vmatprep.subr.mxu0 0.0
    %1704 = vmatpush1.msra.mxu0 0.0
    %1705 = vmatprep.subr.mxu0 0.0
    %1706 = vmatpush1.msra.mxu0 0.0
    %1707 = vmatprep.subr.mxu0 0.0
    %1708 = vmatpush1.msra.mxu0 0.0
    %1709 = vmatprep.subr.mxu0 0.0
    %1710 = vmatpush1.msra.mxu0 0.0
    %1711 = vmatprep.subr.mxu0 0.0
    %1712 = vmatpush1.msra.mxu0 0.0
    %1713 = vmatprep.mubr.f32.mxu0 0.0
    %1714 = vmatmul.mubr.f32.gmra.mrb[0].mxu0 %v1644
    %v1715 = vpop.f32.mrb[0].mxu0
    %v1716 = vadd.f32 0.0, %v1715
    %v1717 = vpop.f32.mrb[0].mxu0
    %1718 = vmatprep.mubr.f32.mxu0 0.0
    %1719 = vmatmul.mubr.f32.gmra.mrb[0].mxu0 %v1647
    %v1720 = vpop.f32.mrb[0].mxu0
    %v1721 = vadd.f32 0.0, %v1720
    %v1722 = vpop.f32.mrb[0].mxu0
    %1723 = vdwg.mxu0
    %v1725 = vsel %vm1473, %v1555, 0
    %v1728 = vsel %vm1473, %v1557, 0
    %1730 = vmatprep.subr.mxu0 0.0
    %1731 = vmatpush1.msra.mxu0 %v999
    %1732 = vmatprep.subr.mxu0 0.0
    %1733 = vmatpush1.msra.mxu0 %v1067
    %1734 = vmatprep.subr.mxu0 0.0
    %1735 = vmatpush1.msra.mxu0 0.0
    %1736 = vmatprep.subr.mxu0 0.0
    %1737 = vmatpush1.msra.mxu0 0.0
    %1738 = vmatprep.subr.mxu0 0.0
    %1739 = vmatpush1.msra.mxu0 0.0
    %1740 = vmatprep.subr.mxu0 0.0
    %1741 = vmatpush1.msra.mxu0 0.0
    %1742 = vmatprep.subr.mxu0 0.0
    %1743 = vmatpush1.msra.mxu0 0.0
    %1744 = vmatprep.subr.mxu0 0.0
    %1745 = vmatpush1.msra.mxu0 0.0
    %1746 = vmatprep.subr.mxu0 0.0
    %1747 = vmatpush1.msra.mxu0 0.0
    %1748 = vmatprep.subr.mxu0 0.0
    %1749 = vmatpush1.msra.mxu0 0.0
    %1750 = vmatprep.subr.mxu0 0.0
    %1751 = vmatpush1.msra.mxu0 0.0
    %1752 = vmatprep.subr.mxu0 0.0
    %1753 = vmatpush1.msra.mxu0 0.0
    %1754 = vmatprep.subr.mxu0 0.0
    %1755 = vmatpush1.msra.mxu0 0.0
    %1756 = vmatprep.subr.mxu0 0.0
    %1757 = vmatpush1.msra.mxu0 0.0
    %1758 = vmatprep.subr.mxu0 0.0
    %1759 = vmatpush1.msra.mxu0 0.0
    %1760 = vmatprep.subr.mxu0 0.0
    %1761 = vmatpush1.msra.mxu0 0.0
    %1762 = vmatprep.subr.mxu0 0.0
    %1763 = vmatpush1.msra.mxu0 0.0
    %1764 = vmatprep.subr.mxu0 0.0
    %1765 = vmatpush1.msra.mxu0 0.0
    %1766 = vmatprep.subr.mxu0 0.0
    %1767 = vmatpush1.msra.mxu0 0.0
    %1768 = vmatprep.subr.mxu0 0.0
    %1769 = vmatpush1.msra.mxu0 0.0
    %1770 = vmatprep.subr.mxu0 0.0
    %1771 = vmatpush1.msra.mxu0 0.0
    %1772 = vmatprep.subr.mxu0 0.0
    %1773 = vmatpush1.msra.mxu0 0.0
    %1774 = vmatprep.subr.mxu0 0.0
    %1775 = vmatpush1.msra.mxu0 0.0
    %1776 = vmatprep.subr.mxu0 0.0
    %1777 = vmatpush1.msra.mxu0 0.0
    %1778 = vmatprep.subr.mxu0 0.0
    %1779 = vmatpush1.msra.mxu0 0.0
    %1780 = vmatprep.subr.mxu0 0.0
    %1781 = vmatpush1.msra.mxu0 0.0
    %1782 = vmatprep.subr.mxu0 0.0
    %1783 = vmatpush1.msra.mxu0 0.0
    %1784 = vmatprep.subr.mxu0 0.0
    %1785 = vmatpush1.msra.mxu0 0.0
    %1786 = vmatprep.subr.mxu0 0.0
    %1787 = vmatpush1.msra.mxu0 0.0
    %1788 = vmatprep.subr.mxu0 0.0
    %1789 = vmatpush1.msra.mxu0 0.0
    %1790 = vmatprep.subr.mxu0 0.0
    %1791 = vmatpush1.msra.mxu0 0.0
    %1792 = vmatprep.subr.mxu0 0.0
    %1793 = vmatpush1.msra.mxu0 0.0
    %1794 = vmatprep.mubr.f32.mxu0 0.0
    %1795 = vmatmul.mubr.f32.gmra.mrb[0].mxu0 %v1725
    %v1796 = vpop.f32.mrb[0].mxu0
    %v1797 = vadd.f32 0.0, %v1796
    %v1798 = vpop.f32.mrb[0].mxu0
    %1799 = vmatprep.mubr.f32.mxu0 0.0
    %1800 = vmatmul.mubr.f32.gmra.mrb[0].mxu0 %v1728
    %v1801 = vpop.f32.mrb[0].mxu0
    %v1802 = vadd.f32 0.0, %v1801
    %v1803 = vpop.f32.mrb[0].mxu0
    %1804 = vdwg.mxu0
    %v1806 = vsel %vm1473, %v1559, 0
    %v1809 = vsel %vm1473, %v1561, 0
    %1811 = vmatprep.subr.mxu0 0.0
    %1812 = vmatpush1.msra.mxu0 %v1000
    %1813 = vmatprep.subr.mxu0 0.0
    %1814 = vmatpush1.msra.mxu0 %v1068
    %1815 = vmatprep.subr.mxu0 0.0
    %1816 = vmatpush1.msra.mxu0 0.0
    %1817 = vmatprep.subr.mxu0 0.0
    %1818 = vmatpush1.msra.mxu0 0.0
    %1819 = vmatprep.subr.mxu0 0.0
    %1820 = vmatpush1.msra.mxu0 0.0
    %1821 = vmatprep.subr.mxu0 0.0
    %1822 = vmatpush1.msra.mxu0 0.0
    %1823 = vmatprep.subr.mxu0 0.0
    %1824 = vmatpush1.msra.mxu0 0.0
    %1825 = vmatprep.subr.mxu0 0.0
    %1826 = vmatpush1.msra.mxu0 0.0
    %1827 = vmatprep.subr.mxu0 0.0
    %1828 = vmatpush1.msra.mxu0 0.0
    %1829 = vmatprep.subr.mxu0 0.0
    %1830 = vmatpush1.msra.mxu0 0.0
    %1831 = vmatprep.subr.mxu0 0.0
    %1832 = vmatpush1.msra.mxu0 0.0
    %1833 = vmatprep.subr.mxu0 0.0
    %1834 = vmatpush1.msra.mxu0 0.0
    %1835 = vmatprep.subr.mxu0 0.0
    %1836 = vmatpush1.msra.mxu0 0.0
    %1837 = vmatprep.subr.mxu0 0.0
    %1838 = vmatpush1.msra.mxu0 0.0
    %1839 = vmatprep.subr.mxu0 0.0
    %1840 = vmatpush1.msra.mxu0 0.0
    %1841 = vmatprep.subr.mxu0 0.0
    %1842 = vmatpush1.msra.mxu0 0.0
    %1843 = vmatprep.subr.mxu0 0.0
    %1844 = vmatpush1.msra.mxu0 0.0
    %1845 = vmatprep.subr.mxu0 0.0
    %1846 = vmatpush1.msra.mxu0 0.0
    %1847 = vmatprep.subr.mxu0 0.0
    %1848 = vmatpush1.msra.mxu0 0.0
    %1849 = vmatprep.subr.mxu0 0.0
    %1850 = vmatpush1.msra.mxu0 0.0
    %1851 = vmatprep.subr.mxu0 0.0
    %1852 = vmatpush1.msra.mxu0 0.0
    %1853 = vmatprep.subr.mxu0 0.0
    %1854 = vmatpush1.msra.mxu0 0.0
    %1855 = vmatprep.subr.mxu0 0.0
    %1856 = vmatpush1.msra.mxu0 0.0
    %1857 = vmatprep.subr.mxu0 0.0
    %1858 = vmatpush1.msra.mxu0 0.0
    %1859 = vmatprep.subr.mxu0 0.0
    %1860 = vmatpush1.msra.mxu0 0.0
    %1861 = vmatprep.subr.mxu0 0.0
    %1862 = vmatpush1.msra.mxu0 0.0
    %1863 = vmatprep.subr.mxu0 0.0
    %1864 = vmatpush1.msra.mxu0 0.0
    %1865 = vmatprep.subr.mxu0 0.0
    %1866 = vmatpush1.msra.mxu0 0.0
    %1867 = vmatprep.subr.mxu0 0.0
    %1868 = vmatpush1.msra.mxu0 0.0
    %1869 = vmatprep.subr.mxu0 0.0
    %1870 = vmatpush1.msra.mxu0 0.0
    %1871 = vmatprep.subr.mxu0 0.0
    %1872 = vmatpush1.msra.mxu0 0.0
    %1873 = vmatprep.subr.mxu0 0.0
    %1874 = vmatpush1.msra.mxu0 0.0
    %1875 = vmatprep.mubr.f32.mxu0 0.0
    %1876 = vmatmul.mubr.f32.gmra.mrb[0].mxu0 %v1806
    %v1877 = vpop.f32.mrb[0].mxu0
    %v1878 = vadd.f32 0.0, %v1877
    %v1879 = vpop.f32.mrb[0].mxu0
    %1880 = vmatprep.mubr.f32.mxu0 0.0
    %1881 = vmatmul.mubr.f32.gmra.mrb[0].mxu0 %v1809
    %v1882 = vpop.f32.mrb[0].mxu0
    %v1883 = vadd.f32 0.0, %v1882
    %v1884 = vpop.f32.mrb[0].mxu0
    %1885 = vdwg.mxu0
    %v1886 = vcombine.low %v1635, %v1797
    %v1887 = vcombine.high %v1635, %v1797
    %v1889 = vunpack.c.l.s4 1983009808
    %v1890 = vunpack.c.0.s8 %v1889
    %v1891 = vlaneseq
    %v1892 = vshrl.u32 %v1891, 7
    %v1893 = vsub.s32 %v1890, %v1892
    %v1894 = vrot.slane %v1886, %v1893
    %v1896 = vunpack.c.l.s4 1983009808
    %v1897 = vunpack.c.0.s8 %v1896
    %v1898 = vlaneseq
    %v1899 = vshrl.u32 %v1898, 7
    %v1900 = vsub.s32 %v1897, %v1899
    %v1901 = vrot.slane %v1887, %v1900
    %v1902 = vcombine.low %v1716, %v1878
    %v1903 = vcombine.high %v1716, %v1878
    %v1905 = vunpack.c.l.s4 1983009808
    %v1906 = vunpack.c.0.s8 %v1905
    %v1907 = vlaneseq
    %v1908 = vshrl.u32 %v1907, 7
    %v1909 = vsub.s32 %v1906, %v1908
    %v1910 = vrot.slane %v1902, %v1909
    %v1912 = vunpack.c.l.s4 1983009808
    %v1913 = vunpack.c.0.s8 %v1912
    %v1914 = vlaneseq
    %v1915 = vshrl.u32 %v1914, 7
    %v1916 = vsub.s32 %v1913, %v1915
    %v1917 = vrot.slane %v1903, %v1916
    %v1918 = vcombine.low %v1894, %v1910
    %v1919 = vcombine.high %v1894, %v1910
    %v1921 = vunpack.c.l.s4 1934713408
    %v1922 = vunpack.c.0.s8 %v1921
    %v1923 = vlaneseq
    %v1924 = vshrl.u32 %v1923, 7
    %v1925 = vsub.s32 %v1922, %v1924
    %v1926 = vrot.slane %v1918, %v1925
    %v1928 = vunpack.c.l.s4 1934713408
    %v1929 = vunpack.c.0.s8 %v1928
    %v1930 = vlaneseq
    %v1931 = vshrl.u32 %v1930, 7
    %v1932 = vsub.s32 %v1929, %v1931
    %v1933 = vrot.slane %v1919, %v1932
    %v1934 = vcombine.low %v1901, %v1917
    %v1935 = vcombine.high %v1901, %v1917
    %v1937 = vunpack.c.l.s4 1934713408
    %v1938 = vunpack.c.0.s8 %v1937
    %v1939 = vlaneseq
    %v1940 = vshrl.u32 %v1939, 7
    %v1941 = vsub.s32 %v1938, %v1940
    %v1942 = vrot.slane %v1934, %v1941
    %v1944 = vunpack.c.l.s4 1934713408
    %v1945 = vunpack.c.0.s8 %v1944
    %v1946 = vlaneseq
    %v1947 = vshrl.u32 %v1946, 7
    %v1948 = vsub.s32 %v1945, %v1947
    %v1949 = vrot.slane %v1935, %v1948
    %v1950 = vcombine.high %v1926, 0.0
    %v1951 = vcombine.high %v1933, 0.0
    %v1952 = vcombine.high %v1942, 0.0
    %v1953 = vcombine.high %v1949, 0.0
    %v1954 = vcombine.low %v1640, %v1802
    %v1955 = vcombine.high %v1640, %v1802
    %v1957 = vunpack.c.l.s4 1983009808
    %v1958 = vunpack.c.0.s8 %v1957
    %v1959 = vlaneseq
    %v1960 = vshrl.u32 %v1959, 7
    %v1961 = vsub.s32 %v1958, %v1960
    %v1962 = vrot.slane %v1954, %v1961
    %v1964 = vunpack.c.l.s4 1983009808
    %v1965 = vunpack.c.0.s8 %v1964
    %v1966 = vlaneseq
    %v1967 = vshrl.u32 %v1966, 7
    %v1968 = vsub.s32 %v1965, %v1967
    %v1969 = vrot.slane %v1955, %v1968
    %v1970 = vcombine.low %v1721, %v1883
    %v1971 = vcombine.high %v1721, %v1883
    %v1973 = vunpack.c.l.s4 1983009808
    %v1974 = vunpack.c.0.s8 %v1973
    %v1975 = vlaneseq
    %v1976 = vshrl.u32 %v1975, 7
    %v1977 = vsub.s32 %v1974, %v1976
    %v1978 = vrot.slane %v1970, %v1977
    %v1980 = vunpack.c.l.s4 1983009808
    %v1981 = vunpack.c.0.s8 %v1980
    %v1982 = vlaneseq
    %v1983 = vshrl.u32 %v1982, 7
    %v1984 = vsub.s32 %v1981, %v1983
    %v1985 = vrot.slane %v1971, %v1984
    %v1986 = vcombine.low %v1962, %v1978
    %v1987 = vcombine.high %v1962, %v1978
    %v1989 = vunpack.c.l.s4 1934713408
    %v1990 = vunpack.c.0.s8 %v1989
    %v1991 = vlaneseq
    %v1992 = vshrl.u32 %v1991, 7
    %v1993 = vsub.s32 %v1990, %v1992
    %v1994 = vrot.slane %v1986, %v1993
    %v1996 = vunpack.c.l.s4 1934713408
    %v1997 = vunpack.c.0.s8 %v1996
    %v1998 = vlaneseq
    %v1999 = vshrl.u32 %v1998, 7
    %v2000 = vsub.s32 %v1997, %v1999
    %v2001 = vrot.slane %v1987, %v2000
    %v2002 = vcombine.low %v1969, %v1985
    %v2003 = vcombine.high %v1969, %v1985
    %v2005 = vunpack.c.l.s4 1934713408
    %v2006 = vunpack.c.0.s8 %v2005
    %v2007 = vlaneseq
    %v2008 = vshrl.u32 %v2007, 7
    %v2009 = vsub.s32 %v2006, %v2008
    %v2010 = vrot.slane %v2002, %v2009
    %v2012 = vunpack.c.l.s4 1934713408
    %v2013 = vunpack.c.0.s8 %v2012
    %v2014 = vlaneseq
    %v2015 = vshrl.u32 %v2014, 7
    %v2016 = vsub.s32 %v2013, %v2015
    %v2017 = vrot.slane %v2003, %v2016
    %v2018 = vcombine.high %v1994, 0.0
    %v2019 = vcombine.high %v2001, 0.0
    %v2020 = vcombine.high %v2010, 0.0
    %v2021 = vcombine.high %v2017, 0.0
    %v2022 = vcombine.low %v1926, %v1933
    %v2024 = vunpack.c.l.s4 1983009808
    %v2025 = vunpack.c.0.s8 %v2024
    %v2026 = vlaneseq
    %v2027 = vshrl.u32 %v2026, 7
    %v2028 = vsub.s32 %v2025, %v2027
    %v2029 = vrot.slane %v2022, %v2028
    %v2030 = vcombine.low %v1950, %v1951
    %v2032 = vunpack.c.l.s4 1983009808
    %v2033 = vunpack.c.0.s8 %v2032
    %v2034 = vlaneseq
    %v2035 = vshrl.u32 %v2034, 7
    %v2036 = vsub.s32 %v2033, %v2035
    %v2037 = vrot.slane %v2030, %v2036
    %v2038 = vcombine.low %v1942, %v1949
    %v2040 = vunpack.c.l.s4 1983009808
    %v2041 = vunpack.c.0.s8 %v2040
    %v2042 = vlaneseq
    %v2043 = vshrl.u32 %v2042, 7
    %v2044 = vsub.s32 %v2041, %v2043
    %v2045 = vrot.slane %v2038, %v2044
    %v2046 = vcombine.low %v1952, %v1953
    %v2048 = vunpack.c.l.s4 1983009808
    %v2049 = vunpack.c.0.s8 %v2048
    %v2050 = vlaneseq
    %v2051 = vshrl.u32 %v2050, 7
    %v2052 = vsub.s32 %v2049, %v2051
    %v2053 = vrot.slane %v2046, %v2052
    %v2054 = vcombine.low %v2029, %v2037
    %v2055 = vcombine.high %v2029, %v2037
    %v2057 = vunpack.c.l.s4 1934713408
    %v2058 = vunpack.c.0.s8 %v2057
    %v2059 = vlaneseq
    %v2060 = vshrl.u32 %v2059, 7
    %v2061 = vsub.s32 %v2058, %v2060
    %v2062 = vrot.slane %v2054, %v2061
    %v2064 = vunpack.c.l.s4 1934713408
    %v2065 = vunpack.c.0.s8 %v2064
    %v2066 = vlaneseq
    %v2067 = vshrl.u32 %v2066, 7
    %v2068 = vsub.s32 %v2065, %v2067
    %v2069 = vrot.slane %v2055, %v2068
    %v2070 = vcombine.low %v2045, %v2053
    %v2071 = vcombine.high %v2045, %v2053
    %v2073 = vunpack.c.l.s4 1934713408
    %v2074 = vunpack.c.0.s8 %v2073
    %v2075 = vlaneseq
    %v2076 = vshrl.u32 %v2075, 7
    %v2077 = vsub.s32 %v2074, %v2076
    %v2078 = vrot.slane %v2070, %v2077
    %v2080 = vunpack.c.l.s4 1934713408
    %v2081 = vunpack.c.0.s8 %v2080
    %v2082 = vlaneseq
    %v2083 = vshrl.u32 %v2082, 7
    %v2084 = vsub.s32 %v2081, %v2083
    %v2085 = vrot.slane %v2071, %v2084
    %v2086 = vcombine.low %v2062, %v2078
    %v2087 = vcombine.high %v2062, %v2078
    %v2088 = vcombine.low %v2069, %v2085
    %v2089 = vcombine.high %v2069, %v2085
    %v2090 = vcombine.low %v1994, %v2001
    %v2092 = vunpack.c.l.s4 1983009808
    %v2093 = vunpack.c.0.s8 %v2092
    %v2094 = vlaneseq
    %v2095 = vshrl.u32 %v2094, 7
    %v2096 = vsub.s32 %v2093, %v2095
    %v2097 = vrot.slane %v2090, %v2096
    %v2098 = vcombine.low %v2018, %v2019
    %v2100 = vunpack.c.l.s4 1983009808
    %v2101 = vunpack.c.0.s8 %v2100
    %v2102 = vlaneseq
    %v2103 = vshrl.u32 %v2102, 7
    %v2104 = vsub.s32 %v2101, %v2103
    %v2105 = vrot.slane %v2098, %v2104
    %v2106 = vcombine.low %v2010, %v2017
    %v2108 = vunpack.c.l.s4 1983009808
    %v2109 = vunpack.c.0.s8 %v2108
    %v2110 = vlaneseq
    %v2111 = vshrl.u32 %v2110, 7
    %v2112 = vsub.s32 %v2109, %v2111
    %v2113 = vrot.slane %v2106, %v2112
    %v2114 = vcombine.low %v2020, %v2021
    %v2116 = vunpack.c.l.s4 1983009808
    %v2117 = vunpack.c.0.s8 %v2116
    %v2118 = vlaneseq
    %v2119 = vshrl.u32 %v2118, 7
    %v2120 = vsub.s32 %v2117, %v2119
    %v2121 = vrot.slane %v2114, %v2120
    %v2122 = vcombine.low %v2097, %v2105
    %v2123 = vcombine.high %v2097, %v2105
    %v2125 = vunpack.c.l.s4 1934713408
    %v2126 = vunpack.c.0.s8 %v2125
    %v2127 = vlaneseq
    %v2128 = vshrl.u32 %v2127, 7
    %v2129 = vsub.s32 %v2126, %v2128
    %v2130 = vrot.slane %v2122, %v2129
    %v2132 = vunpack.c.l.s4 1934713408
    %v2133 = vunpack.c.0.s8 %v2132
    %v2134 = vlaneseq
    %v2135 = vshrl.u32 %v2134, 7
    %v2136 = vsub.s32 %v2133, %v2135
    %v2137 = vrot.slane %v2123, %v2136
    %v2138 = vcombine.low %v2113, %v2121
    %v2139 = vcombine.high %v2113, %v2121
    %v2141 = vunpack.c.l.s4 1934713408
    %v2142 = vunpack.c.0.s8 %v2141
    %v2143 = vlaneseq
    %v2144 = vshrl.u32 %v2143, 7
    %v2145 = vsub.s32 %v2142, %v2144
    %v2146 = vrot.slane %v2138, %v2145
    %v2148 = vunpack.c.l.s4 1934713408
    %v2149 = vunpack.c.0.s8 %v2148
    %v2150 = vlaneseq
    %v2151 = vshrl.u32 %v2150, 7
    %v2152 = vsub.s32 %v2149, %v2151
    %v2153 = vrot.slane %v2139, %v2152
    %v2154 = vcombine.low %v2130, %v2146
    %v2155 = vcombine.high %v2130, %v2146
    %v2156 = vcombine.low %v2137, %v2153
    %v2157 = vcombine.high %v2137, %v2153
    %2160 = vrot.lane.b32.xlu0 %v2087, 8
    %v2161 = vpop.permute.xlu0 %2160
    %2162 = vrot.lane.b32.xlu0 %v2155, 8
    %v2163 = vpop.permute.xlu0 %2162
    %2168 = vrot.lane.b32.xlu0 %v2088, 16
    %v2169 = vpop.permute.xlu0 %2168
    %2170 = vrot.lane.b32.xlu0 %v2156, 16
    %v2171 = vpop.permute.xlu0 %2170
    %2176 = vrot.lane.b32.xlu0 %v2089, 24
    %v2177 = vpop.permute.xlu0 %2176
    %2178 = vrot.lane.b32.xlu0 %v2157, 24
    %v2179 = vpop.permute.xlu0 %2178
    %v2182 = vsel %vm1069, %v2086, %v2161
    %v2183 = vsel %vm1069, %v2154, %v2163
    %v2184 = vsel %vm1473, %v2182, %v2169
    %v2185 = vsel %vm1473, %v2183, %v2171
    %vm2186 = vcmask 195584
    %v2187 = vsel %vm2186, %v2184, %v2177
    %v2188 = vsel %vm2186, %v2185, %v2179
    %v2189 = vld [vmem:[%s5] sm:$0xff]
    %v2190 = vld [vmem:[%s5 + $0x8] sm:$0xff]
    %v2191 = vld [vmem:[%s5 + $0x10] sm:$0xff]
    %v2192 = vld [vmem:[%s5 + $0x18] sm:$0xff]
    %v2193 = vld [vmem:[%s6] sm:$0x1]
    %v2195 = vlaneseq
    %v2196 = vshrl.u32 %v2195, 7
    %v2197 = vsub.s32 0, %v2196
    %v2198 = vrot.slane %v2193, %v2197
    %v2201 = vsel %vm49, %v2187, 0
    %v2204 = vsel %vm49, %v2188, 0
    %2206 = vmatprep.subr.mxu0 0.0
    %2207 = vmatpush1.msra.mxu0 %v2189
    %2208 = vmatprep.subr.mxu0 0.0
    %2209 = vmatpush1.msra.mxu0 %v2190
    %2210 = vmatprep.subr.mxu0 0.0
    %2211 = vmatpush1.msra.mxu0 %v2191
    %2212 = vmatprep.subr.mxu0 0.0
    %2213 = vmatpush1.msra.mxu0 %v2192
    %2214 = vmatprep.subr.mxu0 0.0
    %2215 = vmatpush1.msra.mxu0 0.0
    %2216 = vmatprep.subr.mxu0 0.0
    %2217 = vmatpush1.msra.mxu0 0.0
    %2218 = vmatprep.subr.mxu0 0.0
    %2219 = vmatpush1.msra.mxu0 0.0
    %2220 = vmatprep.subr.mxu0 0.0
    %2221 = vmatpush1.msra.mxu0 0.0
    %2222 = vmatprep.subr.mxu0 0.0
    %2223 = vmatpush1.msra.mxu0 0.0
    %2224 = vmatprep.subr.mxu0 0.0
    %2225 = vmatpush1.msra.mxu0 0.0
    %2226 = vmatprep.subr.mxu0 0.0
    %2227 = vmatpush1.msra.mxu0 0.0
    %2228 = vmatprep.subr.mxu0 0.0
    %2229 = vmatpush1.msra.mxu0 0.0
    %2230 = vmatprep.subr.mxu0 0.0
    %2231 = vmatpush1.msra.mxu0 0.0
    %2232 = vmatprep.subr.mxu0 0.0
    %2233 = vmatpush1.msra.mxu0 0.0
    %2234 = vmatprep.subr.mxu0 0.0
    %2235 = vmatpush1.msra.mxu0 0.0
    %2236 = vmatprep.subr.mxu0 0.0
    %2237 = vmatpush1.msra.mxu0 0.0
    %2238 = vmatprep.subr.mxu0 0.0
    %2239 = vmatpush1.msra.mxu0 0.0
    %2240 = vmatprep.subr.mxu0 0.0
    %2241 = vmatpush1.msra.mxu0 0.0
    %2242 = vmatprep.subr.mxu0 0.0
    %2243 = vmatpush1.msra.mxu0 0.0
    %2244 = vmatprep.subr.mxu0 0.0
    %2245 = vmatpush1.msra.mxu0 0.0
    %2246 = vmatprep.subr.mxu0 0.0
    %2247 = vmatpush1.msra.mxu0 0.0
    %2248 = vmatprep.subr.mxu0 0.0
    %2249 = vmatpush1.msra.mxu0 0.0
    %2250 = vmatprep.subr.mxu0 0.0
    %2251 = vmatpush1.msra.mxu0 0.0
    %2252 = vmatprep.subr.mxu0 0.0
    %2253 = vmatpush1.msra.mxu0 0.0
    %2254 = vmatprep.subr.mxu0 0.0
    %2255 = vmatpush1.msra.mxu0 0.0
    %2256 = vmatprep.subr.mxu0 0.0
    %2257 = vmatpush1.msra.mxu0 0.0
    %2258 = vmatprep.subr.mxu0 0.0
    %2259 = vmatpush1.msra.mxu0 0.0
    %2260 = vmatprep.subr.mxu0 0.0
    %2261 = vmatpush1.msra.mxu0 0.0
    %2262 = vmatprep.subr.mxu0 0.0
    %2263 = vmatpush1.msra.mxu0 0.0
    %2264 = vmatprep.subr.mxu0 0.0
    %2265 = vmatpush1.msra.mxu0 0.0
    %2266 = vmatprep.subr.mxu0 0.0
    %2267 = vmatpush1.msra.mxu0 0.0
    %2268 = vmatprep.subr.mxu0 0.0
    %2269 = vmatpush1.msra.mxu0 0.0
    %2270 = vmatprep.mubr.f32.mxu0 0.0
    %2271 = vmatmul.mubr.f32.gmra.mrb[0].mxu0 %v2201
    %v2272 = vpop.f32.mrb[0].mxu0
    %v2273 = vadd.f32 %v2198, %v2272
    %v2274 = vpop.f32.mrb[0].mxu0
    %2275 = vmatprep.mubr.f32.mxu0 0.0
    %2276 = vmatmul.mubr.f32.gmra.mrb[0].mxu0 %v2204
    %v2277 = vpop.f32.mrb[0].mxu0
    %v2278 = vadd.f32 %v2198, %v2277
    %v2279 = vpop.f32.mrb[0].mxu0
    %2280 = vdwg.mxu0
    %v2281 = vadd.f32 %v45, %v2273
    %v2282 = vadd.f32 %v46, %v2278
    %v2283 = vld [vmem:[%s7] sm:$0x1]
    %v2284 = vld [vmem:[%s8] sm:$0x1]
    %v2285 = vsel %vm49, %v2281, 0.0
    %2286 = vadd.xlane.f32.xlu0 %v2285
    %v2287 = vpop.xlane.xlu0 %2286
    %v2288 = vsel %vm49, %v2282, 0.0
    %2289 = vadd.xlane.f32.xlu0 %v2288
    %v2290 = vpop.xlane.xlu0 %2289
    %v2291 = vmul.f32 %v2287, %v56
    %v2292 = vmul.f32 %v2290, %v56
    %v2293 = vsub.f32 %v2281, %v2291
    %v2294 = vsub.f32 %v2282, %v2292
    %v2295 = vmul.f32 %v2293, %v2293
    %v2296 = vmul.f32 %v2294, %v2294
    %v2297 = vsel %vm49, %v2295, 0.0
    %2298 = vadd.xlane.f32.xlu0 %v2297
    %v2299 = vpop.xlane.xlu0 %2298
    %v2300 = vsel %vm49, %v2296, 0.0
    %2301 = vadd.xlane.f32.xlu0 %v2300
    %v2302 = vpop.xlane.xlu0 %2301
    %v2303 = vmul.f32 %v2299, %v56
    %v2304 = vmul.f32 %v2302, %v56
    %v2305 = vadd.f32 %v2303, 1e-12
    %v2306 = vadd.f32 %v2304, 1e-12
    %v2307 = vrsqrt.pop %v2305
    %v2308 = vrsqrt.pop %v2306
    %v2309 = vmul.f32 %v2293, %v2307
    %v2310 = vmul.f32 %v2294, %v2308
    %v2312 = vlaneseq
    %v2313 = vshrl.u32 %v2312, 7
    %v2314 = vsub.s32 0, %v2313
    %v2315 = vrot.slane %v2283, %v2314
    %v2317 = vmul.f32 %v2315, %v2309
    %v2318 = vmul.f32 %v2315, %v2310
    %v2320 = vlaneseq
    %v2321 = vshrl.u32 %v2320, 7
    %v2322 = vsub.s32 0, %v2321
    %v2323 = vrot.slane %v2284, %v2322
    %v2325 = vadd.f32 %v2317, %v2323
    %v2326 = vadd.f32 %v2318, %v2323
    %v2327 = vld [vmem:[%s9] sm:$0xff]
    %v2328 = vld [vmem:[%s9 + $0x8] sm:$0xff]
    %v2329 = vld [vmem:[%s9 + $0x10] sm:$0xff]
    %v2330 = vld [vmem:[%s9 + $0x18] sm:$0xff]
    %v2331 = vld [vmem:[%s10] sm:$0x1]
    %v2333 = vlaneseq
    %v2334 = vshrl.u32 %v2333, 7
    %v2335 = vsub.s32 0, %v2334
    %v2336 = vrot.slane %v2331, %v2335
    %v2339 = vsel %vm49, %v2325, 0
    %v2342 = vsel %vm49, %v2326, 0
    %2344 = vmatprep.subr.mxu0 0.0
    %2345 = vmatpush1.msra.mxu0 %v2327
    %2346 = vmatprep.subr.mxu0 0.0
    %2347 = vmatpush1.msra.mxu0 %v2328
    %2348 = vmatprep.subr.mxu0 0.0
    %2349 = vmatpush1.msra.mxu0 %v2329
    %2350 = vmatprep.subr.mxu0 0.0
    %2351 = vmatpush1.msra.mxu0 %v2330
    %2352 = vmatprep.subr.mxu0 0.0
    %2353 = vmatpush1.msra.mxu0 0.0
    %2354 = vmatprep.subr.mxu0 0.0
    %2355 = vmatpush1.msra.mxu0 0.0
    %2356 = vmatprep.subr.mxu0 0.0
    %2357 = vmatpush1.msra.mxu0 0.0
    %2358 = vmatprep.subr.mxu0 0.0
    %2359 = vmatpush1.msra.mxu0 0.0
    %2360 = vmatprep.subr.mxu0 0.0
    %2361 = vmatpush1.msra.mxu0 0.0
    %2362 = vmatprep.subr.mxu0 0.0
    %2363 = vmatpush1.msra.mxu0 0.0
    %2364 = vmatprep.subr.mxu0 0.0
    %2365 = vmatpush1.msra.mxu0 0.0
    %2366 = vmatprep.subr.mxu0 0.0
    %2367 = vmatpush1.msra.mxu0 0.0
    %2368 = vmatprep.subr.mxu0 0.0
    %2369 = vmatpush1.msra.mxu0 0.0
    %2370 = vmatprep.subr.mxu0 0.0
    %2371 = vmatpush1.msra.mxu0 0.0
    %2372 = vmatprep.subr.mxu0 0.0
    %2373 = vmatpush1.msra.mxu0 0.0
    %2374 = vmatprep.subr.mxu0 0.0
    %2375 = vmatpush1.msra.mxu0 0.0
    %2376 = vmatprep.subr.mxu0 0.0
    %2377 = vmatpush1.msra.mxu0 0.0
    %2378 = vmatprep.subr.mxu0 0.0
    %2379 = vmatpush1.msra.mxu0 0.0
    %2380 = vmatprep.subr.mxu0 0.0
    %2381 = vmatpush1.msra.mxu0 0.0
    %2382 = vmatprep.subr.mxu0 0.0
    %2383 = vmatpush1.msra.mxu0 0.0
    %2384 = vmatprep.subr.mxu0 0.0
    %2385 = vmatpush1.msra.mxu0 0.0
    %2386 = vmatprep.subr.mxu0 0.0
    %2387 = vmatpush1.msra.mxu0 0.0
    %2388 = vmatprep.subr.mxu0 0.0
    %2389 = vmatpush1.msra.mxu0 0.0
    %2390 = vmatprep.subr.mxu0 0.0
    %2391 = vmatpush1.msra.mxu0 0.0
    %2392 = vmatprep.subr.mxu0 0.0
    %2393 = vmatpush1.msra.mxu0 0.0
    %2394 = vmatprep.subr.mxu0 0.0
    %2395 = vmatpush1.msra.mxu0 0.0
    %2396 = vmatprep.subr.mxu0 0.0
    %2397 = vmatpush1.msra.mxu0 0.0
    %2398 = vmatprep.subr.mxu0 0.0
    %2399 = vmatpush1.msra.mxu0 0.0
    %2400 = vmatprep.subr.mxu0 0.0
    %2401 = vmatpush1.msra.mxu0 0.0
    %2402 = vmatprep.subr.mxu0 0.0
    %2403 = vmatpush1.msra.mxu0 0.0
    %2404 = vmatprep.subr.mxu0 0.0
    %2405 = vmatpush1.msra.mxu0 0.0
    %2406 = vmatprep.subr.mxu0 0.0
    %2407 = vmatpush1.msra.mxu0 0.0
    %2408 = vmatprep.mubr.f32.mxu0 0.0
    %2409 = vmatmul.mubr.f32.gmra.mrb[0].mxu0 %v2339
    %v2410 = vpop.f32.mrb[0].mxu0
    %v2411 = vadd.f32 %v2336, %v2410
    %v2412 = vpop.f32.mrb[0].mxu0
    %2413 = vmatprep.mubr.f32.mxu0 0.0
    %2414 = vmatmul.mubr.f32.gmra.mrb[0].mxu0 %v2342
    %v2415 = vpop.f32.mrb[0].mxu0
    %v2416 = vadd.f32 %v2336, %v2415
    %v2417 = vpop.f32.mrb[0].mxu0
    %2418 = vdwg.mxu0
    %v2419 = vmul.f32 %v2411, 1.702
    %v2420 = vmul.f32 %v2416, 1.702
    %v2421 = vxor.u32 %v2419, 2147483648
    %v2422 = vxor.u32 %v2420, 2147483648
    %v2423 = vmul.f32 %v2421, 1.442695
    %v2424 = vpow.pop %v2423
    %v2425 = vmul.f32 %v2422, 1.442695
    %v2426 = vpow.pop %v2425
    %v2427 = vadd.f32 %v2424, 1.0
    %v2428 = vadd.f32 %v2426, 1.0
    %v2429 = vrcp.pop %v2427
    %v2430 = vmul.f32 1.0, %v2429
    %v2431 = vrcp.pop %v2428
    %v2432 = vmul.f32 1.0, %v2431
    %v2433 = vmul.f32 %v2411, %v2430
    %v2434 = vmul.f32 %v2416, %v2432
    %v2435 = vld [vmem:[%s11] sm:$0xff]
    %v2436 = vld [vmem:[%s11 + $0x8] sm:$0xff]
    %v2437 = vld [vmem:[%s11 + $0x10] sm:$0xff]
    %v2438 = vld [vmem:[%s11 + $0x18] sm:$0xff]
    %v2439 = vld [vmem:[%s11 + $0x20] sm:$0xff]
    %v2440 = vld [vmem:[%s11 + $0x28] sm:$0xff]
    %v2441 = vld [vmem:[%s11 + $0x30] sm:$0xff]
    %v2442 = vld [vmem:[%s11 + $0x38] sm:$0xff]
    %v2443 = vld [vmem:[%s11 + $0x40] sm:$0xff]
    %v2444 = vld [vmem:[%s11 + $0x48] sm:$0xff]
    %v2445 = vld [vmem:[%s11 + $0x50] sm:$0xff]
    %v2446 = vld [vmem:[%s11 + $0x58] sm:$0xff]
    %v2447 = vld [vmem:[%s11 + $0x60] sm:$0xff]
    %v2448 = vld [vmem:[%s11 + $0x68] sm:$0xff]
    %v2449 = vld [vmem:[%s11 + $0x70] sm:$0xff]
    %v2450 = vld [vmem:[%s11 + $0x78] sm:$0xff]
    %v2451 = vld [vmem:[%s12] sm:$0x1]
    %v2453 = vlaneseq
    %v2454 = vshrl.u32 %v2453, 7
    %v2455 = vsub.s32 0, %v2454
    %v2456 = vrot.slane %v2451, %v2455
    %2458 = vmatprep.subr.mxu0 0.0
    %2459 = vmatpush1.msra.mxu0 %v2435
    %2460 = vmatprep.subr.mxu0 0.0
    %2461 = vmatpush1.msra.mxu0 %v2436
    %2462 = vmatprep.subr.mxu0 0.0
    %2463 = vmatpush1.msra.mxu0 %v2437
    %2464 = vmatprep.subr.mxu0 0.0
    %2465 = vmatpush1.msra.mxu0 %v2438
    %2466 = vmatprep.subr.mxu0 0.0
    %2467 = vmatpush1.msra.mxu0 %v2439
    %2468 = vmatprep.subr.mxu0 0.0
    %2469 = vmatpush1.msra.mxu0 %v2440
    %2470 = vmatprep.subr.mxu0 0.0
    %2471 = vmatpush1.msra.mxu0 %v2441
    %2472 = vmatprep.subr.mxu0 0.0
    %2473 = vmatpush1.msra.mxu0 %v2442
    %2474 = vmatprep.subr.mxu0 0.0
    %2475 = vmatpush1.msra.mxu0 %v2443
    %2476 = vmatprep.subr.mxu0 0.0
    %2477 = vmatpush1.msra.mxu0 %v2444
    %2478 = vmatprep.subr.mxu0 0.0
    %2479 = vmatpush1.msra.mxu0 %v2445
    %2480 = vmatprep.subr.mxu0 0.0
    %2481 = vmatpush1.msra.mxu0 %v2446
    %2482 = vmatprep.subr.mxu0 0.0
    %2483 = vmatpush1.msra.mxu0 %v2447
    %2484 = vmatprep.subr.mxu0 0.0
    %2485 = vmatpush1.msra.mxu0 %v2448
    %2486 = vmatprep.subr.mxu0 0.0
    %2487 = vmatpush1.msra.mxu0 %v2449
    %2488 = vmatprep.subr.mxu0 0.0
    %2489 = vmatpush1.msra.mxu0 %v2450
    %2490 = vmatprep.subr.mxu0 0.0
    %2491 = vmatpush1.msra.mxu0 0.0
    %2492 = vmatprep.subr.mxu0 0.0
    %2493 = vmatpush1.msra.mxu0 0.0
    %2494 = vmatprep.subr.mxu0 0.0
    %2495 = vmatpush1.msra.mxu0 0.0
    %2496 = vmatprep.subr.mxu0 0.0
    %2497 = vmatpush1.msra.mxu0 0.0
    %2498 = vmatprep.subr.mxu0 0.0
    %2499 = vmatpush1.msra.mxu0 0.0
    %2500 = vmatprep.subr.mxu0 0.0
    %2501 = vmatpush1.msra.mxu0 0.0
    %2502 = vmatprep.subr.mxu0 0.0
    %2503 = vmatpush1.msra.mxu0 0.0
    %2504 = vmatprep.subr.mxu0 0.0
    %2505 = vmatpush1.msra.mxu0 0.0
    %2506 = vmatprep.subr.mxu0 0.0
    %2507 = vmatpush1.msra.mxu0 0.0
    %2508 = vmatprep.subr.mxu0 0.0
    %2509 = vmatpush1.msra.mxu0 0.0
    %2510 = vmatprep.subr.mxu0 0.0
    %2511 = vmatpush1.msra.mxu0 0.0
    %2512 = vmatprep.subr.mxu0 0.0
    %2513 = vmatpush1.msra.mxu0 0.0
    %2514 = vmatprep.subr.mxu0 0.0
    %2515 = vmatpush1.msra.mxu0 0.0
    %2516 = vmatprep.subr.mxu0 0.0
    %2517 = vmatpush1.msra.mxu0 0.0
    %2518 = vmatprep.subr.mxu0 0.0
    %2519 = vmatpush1.msra.mxu0 0.0
    %2520 = vmatprep.subr.mxu0 0.0
    %2521 = vmatpush1.msra.mxu0 0.0
    %2522 = vmatprep.mubr.f32.mxu0 0.0
    %2523 = vmatmul.mubr.f32.gmra.mrb[0].mxu0 %v2433
    %v2524 = vpop.f32.mrb[0].mxu0
    %v2525 = vadd.f32 %v2456, %v2524
    %v2526 = vpop.f32.mrb[0].mxu0
    %2527 = vmatprep.mubr.f32.mxu0 0.0
    %2528 = vmatmul.mubr.f32.gmra.mrb[0].mxu0 %v2434
    %v2529 = vpop.f32.mrb[0].mxu0
    %v2530 = vadd.f32 %v2456, %v2529
    %v2531 = vpop.f32.mrb[0].mxu0
    %2532 = vdwg.mxu0
    %v2533 = vadd.f32 %v2281, %v2525
    %v2534 = vadd.f32 %v2282, %v2530
    %2535 = vst.msk [vmem:[#allocation2] sm:$0xff] %vm49, %v2533
    %2536 = vst.msk [vmem:[#allocation2 + $0x8] sm:$0xff] %vm49, %v2534
    // Predicated region
    $region54: #{tpu_custom_call.1} parent=1 // pred_check
      _
    $region55: #{tpu_custom_call.1} parent=1 // pred_check_branch
      %2538 = sbr.rel (0) target = $region57
    $region56: #{tpu_custom_call.1} parent=1 // pred_region
      %s2540 = ssub.s32 256, 256
      %2541 = vsyncadd [#allocation3], %s2540
      %s2542 = sshll.u32 [#allocation2], 4
      %s2543 = int_to_ptr.vmem [resolvable:$true] %s2542
      %2548 = dma.vmem_to_hbm [thread:$0]  %s2543, 256, %s13, [#allocation3], 128, 128, 8
    $region57: #{tpu_custom_call.1} parent=1 // pred_fallthru
      _
    // Predicated region
    $region58: #{tpu_custom_call.1} parent=1 // pred_check
      _
    $region59: #{tpu_custom_call.1} parent=1 // pred_check_branch
      %2550 = sbr.rel (0) target = $region61
    $region60: #{tpu_custom_call.1} parent=1 // pred_region
      %2551 = dma.done [#allocation3], 256
    $region61: #{tpu_custom_call.1} parent=1 // pred_fallthru
      _
    %2552 = vsyncpa [#allocation3], 1

</llo_original>
